<compile_context>
chip_gen: v6e
topology: v6e:2x2x1
jax: 0.10.0
libtpu: 0.0.40
codegen_flags: <defaults>
</compile_context>

<pallas_src>
import math

import jax
import jax.numpy as jnp
from jax.experimental import pallas as pl
from jax.experimental.pallas import tpu as pltpu

# ---------------- config (small, consistent with the module) ----------------
VOCAB = 256          # config.vocab_size
HIDDEN = 64          # config.hidden_size
N_LAYERS = 2         # config.num_hidden_layers
N_HEADS = 2          # config.num_attention_heads
HEAD_DIM = HIDDEN // N_HEADS
HALF = HEAD_DIM // 2
INTER = 128          # config.intermediate_size
EPS = 1e-5
ROPE_THETA = 10000.0

BATCH = 2
SEQ = 8
BS = BATCH * SEQ
NEG_INF = -1e9       # additive mask value for disallowed attention positions


# ------------------------------- Pallas kernel -------------------------------
def smollm_kernel(ids_ref, bias_ref, cos_ref, sin_ref,
                  embed_ref, embed_t_ref, ln1_ref, wqkv_ref, wo_ref,
                  ln2_ref, wgu_ref, wd_ref, normw_ref,
                  logits_ref):
    f32 = jnp.float32
    bf16 = jnp.bfloat16

    def mm(a, b):          # a @ b, bf16 MXU inputs, f32 accumulation
        return jax.lax.dot_general(a.astype(bf16), b.astype(bf16),
                                   (((1,), (0,)), ((), ())),
                                   preferred_element_type=f32)

    def mm_t(a, b):        # a @ b.T
        return jax.lax.dot_general(a.astype(bf16), b.astype(bf16),
                                   (((1,), (1,)), ((), ())),
                                   preferred_element_type=f32)

    def rmsnorm(x, w):     # f32 elementwise
        var = jnp.mean(x * x, axis=-1, keepdims=True)
        return x * jax.lax.rsqrt(var + EPS) * w

    def softmax_rows(sc):  # f32, reciprocal on the EUP
        m = jnp.max(sc, axis=-1, keepdims=True)
        e = jnp.exp(sc - m)
        return e * pl.reciprocal(jnp.sum(e, axis=-1, keepdims=True), approx=True)

    cos = cos_ref[...]     # (BS, HIDDEN), per-head tiled
    sin = sin_ref[...]     # (BS, HIDDEN)
    bias = bias_ref[...]   # (BS, BS) block-diagonal causal/pad bias

    def rope(x):           # x: (BS, HIDDEN) f32; rotate_half per head via lane slices
        pieces = []
        for hh in range(N_HEADS):
            lo = hh * HEAD_DIM
            pieces.append(-x[:, lo + HALF:lo + HEAD_DIM])
            pieces.append(x[:, lo:lo + HALF])
        rot = jnp.concatenate(pieces, axis=-1)
        return x * cos + rot * sin

    # --- token embedding: one-hot gather realized on the MXU ---
    ids = ids_ref[...]                                            # (BS, 1) int32
    iota_v = jax.lax.broadcasted_iota(jnp.int32, (BS, VOCAB), 1)  # (BS, V)
    onehot = (ids == iota_v).astype(f32)                          # (BS, V)
    h = mm(onehot, embed_ref[...])                                # (BS, H) f32

    for l in range(N_LAYERS):
        # ---------------- self attention ----------------
        resid = h
        hn = rmsnorm(h, ln1_ref[l])                               # (BS, H)
        qkv = mm(hn, wqkv_ref[l])                                 # (BS, 3H) f32
        q = rope(qkv[:, 0:HIDDEN])                                # 1/sqrt(hd) folded into wq
        k = rope(qkv[:, HIDDEN:2 * HIDDEN])
        v = qkv[:, 2 * HIDDEN:3 * HIDDEN]

        ctxs = []
        for hh in range(N_HEADS):
            lo = hh * HEAD_DIM
            qh = q[:, lo:lo + HEAD_DIM]                           # (BS, hd)
            kh = k[:, lo:lo + HEAD_DIM]
            vh = v[:, lo:lo + HEAD_DIM]
            sc = mm_t(qh, kh) + bias                              # (BS, BS)
            p = softmax_rows(sc)                                  # (BS, BS)
            ctxs.append(mm(p, vh))                                # (BS, hd)
        ctx = jnp.concatenate(ctxs, axis=-1)                      # (BS, H)
        h = resid + mm(ctx, wo_ref[l])                            # (BS, H)

        # ---------------- MLP (SwiGLU), fused gate/up ----------------
        resid = h
        hn = rmsnorm(h, ln2_ref[l])                               # (BS, H)
        gu = mm(hn, wgu_ref[l])                                   # (BS, 2I)
        g = gu[:, :INTER]
        u = gu[:, INTER:]
        act = g * pl.reciprocal(1.0 + jnp.exp(-g), approx=True)   # SiLU
        h = resid + mm(act * u, wd_ref[l])                        # (BS, H)

    # ---------------- final norm + tied lm_head (pre-transposed embed) ----------------
    h = rmsnorm(h, normw_ref[...])                                # (BS, H)
    logits_ref[...] = mm(h, embed_t_ref[...])                     # (BS, V) fp32


# ------------------------------ host-side glue ------------------------------
def make_params(key):
    ks = jax.random.split(key, 9)

    def init(k, shape, scale=0.02):
        return (scale * jax.random.normal(k, shape)).astype(jnp.float32)

    return dict(
        embed=init(ks[0], (VOCAB, HIDDEN)),
        ln1=jnp.ones((N_LAYERS, 1, HIDDEN), jnp.float32),
        wq=init(ks[1], (N_LAYERS, N_HEADS, HIDDEN, HEAD_DIM)),
        wk=init(ks[2], (N_LAYERS, N_HEADS, HIDDEN, HEAD_DIM)),
        wv=init(ks[3], (N_LAYERS, N_HEADS, HIDDEN, HEAD_DIM)),
        wo=init(ks[4], (N_LAYERS, N_HEADS, HEAD_DIM, HIDDEN)),
        ln2=jnp.ones((N_LAYERS, 1, HIDDEN), jnp.float32),
        wg=init(ks[5], (N_LAYERS, HIDDEN, INTER)),
        wu=init(ks[6], (N_LAYERS, HIDDEN, INTER)),
        wd=init(ks[7], (N_LAYERS, INTER, HIDDEN)),
        normw=jnp.ones((1, HIDDEN), jnp.float32),
    )


def pack_params(p):
    """Host-side packing: fused QKV (with score scale folded into wq), fused O,
    fused gate/up, pre-transposed tied embedding; MXU weights cast to bf16."""
    scale = 1.0 / math.sqrt(HEAD_DIM)

    def pack_heads(w):  # (L, NH, HID, HD) -> (L, HID, NH*HD), head-major columns
        return jnp.transpose(w, (0, 2, 1, 3)).reshape(N_LAYERS, HIDDEN, N_HEADS * HEAD_DIM)

    wq = pack_heads(p['wq']) * scale
    wk = pack_heads(p['wk'])
    wv = pack_heads(p['wv'])
    return dict(
        embed=p['embed'].astype(jnp.bfloat16),                             # (V, H)
        embed_t=jnp.transpose(p['embed']).astype(jnp.bfloat16),            # (H, V)
        ln1=p['ln1'],
        wqkv=jnp.concatenate([wq, wk, wv], axis=-1).astype(jnp.bfloat16),  # (L, H, 3H)
        wo=p['wo'].reshape(N_LAYERS, N_HEADS * HEAD_DIM, HIDDEN).astype(jnp.bfloat16),
        ln2=p['ln2'],
        wgu=jnp.concatenate([p['wg'], p['wu']], axis=-1).astype(jnp.bfloat16),  # (L, H, 2I)
        wd=p['wd'].astype(jnp.bfloat16),
        normw=p['normw'],
    )


def rope_tables():
    """Per-token, per-head tiled RoPE tables of shape (BS, HIDDEN)."""
    inv_freq = 1.0 / (ROPE_THETA ** (jnp.arange(0, HEAD_DIM, 2, dtype=jnp.float32) / HEAD_DIM))
    pos = jnp.arange(SEQ, dtype=jnp.float32)
    freqs = pos[:, None] * inv_freq[None, :]            # (S, hd/2)
    emb = jnp.concatenate([freqs, freqs], axis=-1)      # (S, hd)
    cos = jnp.tile(jnp.cos(emb), (BATCH, N_HEADS))      # (BS, HIDDEN)
    sin = jnp.tile(jnp.sin(emb), (BATCH, N_HEADS))
    return cos, sin


def build_bias(attention_mask):
    """(BS, BS) additive bias: block-diagonal over batches, causal, key-padding.
    Cross-batch and disallowed positions get NEG_INF."""
    tok = jnp.arange(BS)
    b_idx = tok // SEQ
    s_idx = tok % SEQ
    same_batch = b_idx[:, None] == b_idx[None, :]
    causal = s_idx[None, :] <= s_idx[:, None]
    key_ok = attention_mask.astype(bool).reshape(BS)[None, :]
    allowed = same_batch & causal & key_ok
    return jnp.where(allowed, 0.0, NEG_INF).astype(jnp.float32)


@jax.jit
def smollm_forward(input_ids, attention_mask, packed, cos, sin):
    bias = build_bias(attention_mask)
    ids_flat = input_ids.astype(jnp.int32).reshape(BS, 1)
    vmem = pl.BlockSpec(memory_space=pltpu.MemorySpace.VMEM)

    logits_flat = pl.pallas_call(
        smollm_kernel,
        out_shape=jax.ShapeDtypeStruct((BS, VOCAB), jnp.float32),
        in_specs=[vmem] * 13,
        out_specs=vmem,
        compiler_params=pltpu.CompilerParams(vmem_limit_bytes=32 * 1024 * 1024),
    )(ids_flat, bias, cos, sin,
      packed['embed'], packed['embed_t'], packed['ln1'], packed['wqkv'],
      packed['wo'], packed['ln2'], packed['wgu'], packed['wd'], packed['normw'])

    return {'logits': logits_flat.reshape(BATCH, SEQ, VOCAB)}


if __name__ == "__main__":
    key = jax.random.PRNGKey(0)
    pkey, ikey = jax.random.split(key)

    params = make_params(pkey)
    packed = pack_params(params)
    cos, sin = rope_tables()

    input_ids = jax.random.randint(ikey, (BATCH, SEQ), 0, VOCAB, dtype=jnp.int32)
    attention_mask = jnp.ones((BATCH, SEQ), jnp.int32)

    out = smollm_forward(input_ids, attention_mask, packed, cos, sin)
    logits = jax.block_until_ready(out['logits'])

    assert logits.shape == (BATCH, SEQ, VOCAB)
    assert logits.dtype == jnp.float32
    assert bool(jnp.all(jnp.isfinite(logits)))
    print("KERNEL_OK")
</pallas_src>

<mosaic_0001>
module attributes {stable_mosaic.version = 11 : i64} {
  func.func @smollm_kernel(%arg0: memref<16x1xi32, #tpu.memory_space<vmem>>, %arg1: memref<16x16xf32, #tpu.memory_space<vmem>>, %arg2: memref<16x64xf32, #tpu.memory_space<vmem>>, %arg3: memref<16x64xf32, #tpu.memory_space<vmem>>, %arg4: memref<256x64xbf16, #tpu.memory_space<vmem>>, %arg5: memref<64x256xbf16, #tpu.memory_space<vmem>>, %arg6: memref<2x1x64xf32, #tpu.memory_space<vmem>>, %arg7: memref<2x64x192xbf16, #tpu.memory_space<vmem>>, %arg8: memref<2x64x64xbf16, #tpu.memory_space<vmem>>, %arg9: memref<2x1x64xf32, #tpu.memory_space<vmem>>, %arg10: memref<2x64x256xbf16, #tpu.memory_space<vmem>>, %arg11: memref<2x128x64xbf16, #tpu.memory_space<vmem>>, %arg12: memref<1x64xf32, #tpu.memory_space<vmem>>, %arg13: memref<16x256xf32, #tpu.memory_space<vmem>>) attributes {dimension_semantics = [], scalar_prefetch = 0 : i64, scratch_operands = 0 : i64, tpu.core_type = #tpu.core_type<tc>} {
    %c0 = arith.constant 0 : index
    %c0_0 = arith.constant 0 : index
    %0 = vector.load %arg2[%c0, %c0_0] : memref<16x64xf32, #tpu.memory_space<vmem>>, vector<16x64xf32>
    %c0_1 = arith.constant 0 : index
    %c0_2 = arith.constant 0 : index
    %1 = vector.load %arg3[%c0_1, %c0_2] : memref<16x64xf32, #tpu.memory_space<vmem>>, vector<16x64xf32>
    %c0_3 = arith.constant 0 : index
    %c0_4 = arith.constant 0 : index
    %2 = vector.load %arg1[%c0_3, %c0_4] : memref<16x16xf32, #tpu.memory_space<vmem>>, vector<16x16xf32>
    %c0_5 = arith.constant 0 : index
    %c0_6 = arith.constant 0 : index
    %3 = vector.load %arg0[%c0_5, %c0_6] : memref<16x1xi32, #tpu.memory_space<vmem>>, vector<16x1xi32>
    %4 = tpu.iota {dimensions = array<i32: 1>} : vector<16x256xi32>
    %5 = vector.broadcast %3 : vector<16x1xi32> to vector<16x256xi32>
    %6 = arith.cmpi eq, %5, %4 : vector<16x256xi32>
    %7 = arith.extui %6 : vector<16x256xi1> to vector<16x256xi32>
    %8 = arith.sitofp %7 : vector<16x256xi32> to vector<16x256xf32>
    %c0_7 = arith.constant 0 : index
    %c0_8 = arith.constant 0 : index
    %9 = vector.load %arg4[%c0_7, %c0_8] : memref<256x64xbf16, #tpu.memory_space<vmem>>, vector<256x64xbf16>
    %10 = arith.truncf %8 : vector<16x256xf32> to vector<16x256xbf16>
    %cst = arith.constant dense<0.000000e+00> : vector<16x64xf32>
    %11 = tpu.matmul %10, %9, %cst {dimension_numbers = #tpu.dot_dimension_numbers<[1], [0], [0], [1], [0, 0, 1, 1], [], []>} : vector<16x256xbf16>, vector<256x64xbf16>, vector<16x64xf32> -> vector<16x64xf32>
    %c0_9 = arith.constant 0 : index
    %c0_10 = arith.constant 0 : index
    %c0_11 = arith.constant 0 : index
    %12 = vector.load %arg6[%c0_9, %c0_10, %c0_11] : memref<2x1x64xf32, #tpu.memory_space<vmem>>, vector<1x1x64xf32>
    %13 = vector.shape_cast %12 : vector<1x1x64xf32> to vector<1x64xf32>
    %14 = arith.mulf %11, %11 : vector<16x64xf32>
    %cst_12 = arith.constant dense<0.000000e+00> : vector<16xf32>
    %15 = vector.multi_reduction <add>, %14, %cst_12 [1] : vector<16x64xf32> to vector<16xf32>
    %16 = vector.shape_cast %15 : vector<16xf32> to vector<16x1xf32>
    %cst_13 = arith.constant 6.400000e+01 : f32
    %17 = vector.broadcast %cst_13 : f32 to vector<16x1xf32>
    %18 = arith.divf %16, %17 : vector<16x1xf32>
    %cst_14 = arith.constant 9.99999974E-6 : f32
    %19 = vector.broadcast %cst_14 : f32 to vector<16x1xf32>
    %20 = arith.addf %18, %19 : vector<16x1xf32>
    %21 = math.rsqrt %20 : vector<16x1xf32>
    %22 = vector.broadcast %21 : vector<16x1xf32> to vector<16x64xf32>
    %23 = arith.mulf %11, %22 : vector<16x64xf32>
    %24 = vector.broadcast %13 : vector<1x64xf32> to vector<16x64xf32>
    %25 = arith.mulf %23, %24 : vector<16x64xf32>
    %c0_15 = arith.constant 0 : index
    %c0_16 = arith.constant 0 : index
    %c0_17 = arith.constant 0 : index
    %26 = vector.load %arg7[%c0_15, %c0_16, %c0_17] : memref<2x64x192xbf16, #tpu.memory_space<vmem>>, vector<1x64x192xbf16>
    %27 = vector.shape_cast %26 : vector<1x64x192xbf16> to vector<64x192xbf16>
    %28 = arith.truncf %25 : vector<16x64xf32> to vector<16x64xbf16>
    %cst_18 = arith.constant dense<0.000000e+00> : vector<16x192xf32>
    %29 = tpu.matmul %28, %27, %cst_18 {dimension_numbers = #tpu.dot_dimension_numbers<[1], [0], [0], [1], [0, 0, 1, 1], [], []>} : vector<16x64xbf16>, vector<64x192xbf16>, vector<16x192xf32> -> vector<16x192xf32>
    %30 = vector.extract_strided_slice %29 {offsets = [0, 0], sizes = [16, 64], strides = [1, 1]} : vector<16x192xf32> to vector<16x64xf32>
    %31 = vector.extract_strided_slice %30 {offsets = [0, 16], sizes = [16, 16], strides = [1, 1]} : vector<16x64xf32> to vector<16x16xf32>
    %cst_19 = arith.constant 0.000000e+00 : f32
    %32 = vector.broadcast %cst_19 : f32 to vector<16x16xf32>
    %33 = arith.subf %32, %31 : vector<16x16xf32>
    %34 = vector.extract_strided_slice %30 {offsets = [0, 0], sizes = [16, 16], strides = [1, 1]} : vector<16x64xf32> to vector<16x16xf32>
    %35 = vector.extract_strided_slice %30 {offsets = [0, 48], sizes = [16, 16], strides = [1, 1]} : vector<16x64xf32> to vector<16x16xf32>
    %cst_20 = arith.constant 0.000000e+00 : f32
    %36 = vector.broadcast %cst_20 : f32 to vector<16x16xf32>
    %37 = arith.subf %36, %35 : vector<16x16xf32>
    %38 = vector.extract_strided_slice %30 {offsets = [0, 32], sizes = [16, 16], strides = [1, 1]} : vector<16x64xf32> to vector<16x16xf32>
    %39 = tpu.concatenate %33, %34, %37, %38 in 1 : vector<16x16xf32>, vector<16x16xf32>, vector<16x16xf32>, vector<16x16xf32> -> vector<16x64xf32>
    %40 = arith.mulf %30, %0 : vector<16x64xf32>
    %41 = arith.mulf %39, %1 : vector<16x64xf32>
    %42 = arith.addf %40, %41 : vector<16x64xf32>
    %43 = vector.extract_strided_slice %29 {offsets = [0, 64], sizes = [16, 64], strides = [1, 1]} : vector<16x192xf32> to vector<16x64xf32>
    %44 = vector.extract_strided_slice %43 {offsets = [0, 16], sizes = [16, 16], strides = [1, 1]} : vector<16x64xf32> to vector<16x16xf32>
    %cst_21 = arith.constant 0.000000e+00 : f32
    %45 = vector.broadcast %cst_21 : f32 to vector<16x16xf32>
    %46 = arith.subf %45, %44 : vector<16x16xf32>
    %47 = vector.extract_strided_slice %43 {offsets = [0, 0], sizes = [16, 16], strides = [1, 1]} : vector<16x64xf32> to vector<16x16xf32>
    %48 = vector.extract_strided_slice %43 {offsets = [0, 48], sizes = [16, 16], strides = [1, 1]} : vector<16x64xf32> to vector<16x16xf32>
    %cst_22 = arith.constant 0.000000e+00 : f32
    %49 = vector.broadcast %cst_22 : f32 to vector<16x16xf32>
    %50 = arith.subf %49, %48 : vector<16x16xf32>
    %51 = vector.extract_strided_slice %43 {offsets = [0, 32], sizes = [16, 16], strides = [1, 1]} : vector<16x64xf32> to vector<16x16xf32>
    %52 = tpu.concatenate %46, %47, %50, %51 in 1 : vector<16x16xf32>, vector<16x16xf32>, vector<16x16xf32>, vector<16x16xf32> -> vector<16x64xf32>
    %53 = arith.mulf %43, %0 : vector<16x64xf32>
    %54 = arith.mulf %52, %1 : vector<16x64xf32>
    %55 = arith.addf %53, %54 : vector<16x64xf32>
    %56 = vector.extract_strided_slice %29 {offsets = [0, 128], sizes = [16, 64], strides = [1, 1]} : vector<16x192xf32> to vector<16x64xf32>
    %57 = vector.extract_strided_slice %42 {offsets = [0, 0], sizes = [16, 32], strides = [1, 1]} : vector<16x64xf32> to vector<16x32xf32>
    %58 = vector.extract_strided_slice %55 {offsets = [0, 0], sizes = [16, 32], strides = [1, 1]} : vector<16x64xf32> to vector<16x32xf32>
    %59 = vector.extract_strided_slice %56 {offsets = [0, 0], sizes = [16, 32], strides = [1, 1]} : vector<16x64xf32> to vector<16x32xf32>
    %60 = arith.truncf %57 : vector<16x32xf32> to vector<16x32xbf16>
    %61 = arith.truncf %58 : vector<16x32xf32> to vector<16x32xbf16>
    %cst_23 = arith.constant dense<0.000000e+00> : vector<16x16xf32>
    %62 = tpu.matmul %60, %61, %cst_23 {dimension_numbers = #tpu.dot_dimension_numbers<[1], [1], [0], [0], [0, 0, 1, 0], [], []>} : vector<16x32xbf16>, vector<16x32xbf16>, vector<16x16xf32> -> vector<16x16xf32>
    %63 = arith.addf %62, %2 : vector<16x16xf32>
    %cst_24 = arith.constant dense<0xFF800000> : vector<16xf32>
    %64 = vector.multi_reduction <maximumf>, %63, %cst_24 [1] : vector<16x16xf32> to vector<16xf32>
    %65 = vector.shape_cast %64 : vector<16xf32> to vector<16x1xf32>
    %66 = vector.broadcast %65 : vector<16x1xf32> to vector<16x16xf32>
    %67 = arith.subf %63, %66 : vector<16x16xf32>
    %68 = math.exp %67 : vector<16x16xf32>
    %cst_25 = arith.constant dense<0.000000e+00> : vector<16xf32>
    %69 = vector.multi_reduction <add>, %68, %cst_25 [1] : vector<16x16xf32> to vector<16xf32>
    %70 = vector.shape_cast %69 : vector<16xf32> to vector<16x1xf32>
    %71 = tpu.reciprocal %70 {approx = true} : vector<16x1xf32> -> vector<16x1xf32>
    %72 = vector.broadcast %71 : vector<16x1xf32> to vector<16x16xf32>
    %73 = arith.mulf %68, %72 : vector<16x16xf32>
    %74 = arith.truncf %73 : vector<16x16xf32> to vector<16x16xbf16>
    %75 = arith.truncf %59 : vector<16x32xf32> to vector<16x32xbf16>
    %cst_26 = arith.constant dense<0.000000e+00> : vector<16x32xf32>
    %76 = tpu.matmul %74, %75, %cst_26 {dimension_numbers = #tpu.dot_dimension_numbers<[1], [0], [0], [1], [0, 0, 1, 1], [], []>} : vector<16x16xbf16>, vector<16x32xbf16>, vector<16x32xf32> -> vector<16x32xf32>
    %77 = vector.extract_strided_slice %42 {offsets = [0, 32], sizes = [16, 32], strides = [1, 1]} : vector<16x64xf32> to vector<16x32xf32>
    %78 = vector.extract_strided_slice %55 {offsets = [0, 32], sizes = [16, 32], strides = [1, 1]} : vector<16x64xf32> to vector<16x32xf32>
    %79 = vector.extract_strided_slice %56 {offsets = [0, 32], sizes = [16, 32], strides = [1, 1]} : vector<16x64xf32> to vector<16x32xf32>
    %80 = arith.truncf %77 : vector<16x32xf32> to vector<16x32xbf16>
    %81 = arith.truncf %78 : vector<16x32xf32> to vector<16x32xbf16>
    %cst_27 = arith.constant dense<0.000000e+00> : vector<16x16xf32>
    %82 = tpu.matmul %80, %81, %cst_27 {dimension_numbers = #tpu.dot_dimension_numbers<[1], [1], [0], [0], [0, 0, 1, 0], [], []>} : vector<16x32xbf16>, vector<16x32xbf16>, vector<16x16xf32> -> vector<16x16xf32>
    %83 = arith.addf %82, %2 : vector<16x16xf32>
    %cst_28 = arith.constant dense<0xFF800000> : vector<16xf32>
    %84 = vector.multi_reduction <maximumf>, %83, %cst_28 [1] : vector<16x16xf32> to vector<16xf32>
    %85 = vector.shape_cast %84 : vector<16xf32> to vector<16x1xf32>
    %86 = vector.broadcast %85 : vector<16x1xf32> to vector<16x16xf32>
    %87 = arith.subf %83, %86 : vector<16x16xf32>
    %88 = math.exp %87 : vector<16x16xf32>
    %cst_29 = arith.constant dense<0.000000e+00> : vector<16xf32>
    %89 = vector.multi_reduction <add>, %88, %cst_29 [1] : vector<16x16xf32> to vector<16xf32>
    %90 = vector.shape_cast %89 : vector<16xf32> to vector<16x1xf32>
    %91 = tpu.reciprocal %90 {approx = true} : vector<16x1xf32> -> vector<16x1xf32>
    %92 = vector.broadcast %91 : vector<16x1xf32> to vector<16x16xf32>
    %93 = arith.mulf %88, %92 : vector<16x16xf32>
    %94 = arith.truncf %93 : vector<16x16xf32> to vector<16x16xbf16>
    %95 = arith.truncf %79 : vector<16x32xf32> to vector<16x32xbf16>
    %cst_30 = arith.constant dense<0.000000e+00> : vector<16x32xf32>
    %96 = tpu.matmul %94, %95, %cst_30 {dimension_numbers = #tpu.dot_dimension_numbers<[1], [0], [0], [1], [0, 0, 1, 1], [], []>} : vector<16x16xbf16>, vector<16x32xbf16>, vector<16x32xf32> -> vector<16x32xf32>
    %97 = tpu.concatenate %76, %96 in 1 : vector<16x32xf32>, vector<16x32xf32> -> vector<16x64xf32>
    %c0_31 = arith.constant 0 : index
    %c0_32 = arith.constant 0 : index
    %c0_33 = arith.constant 0 : index
    %98 = vector.load %arg8[%c0_31, %c0_32, %c0_33] : memref<2x64x64xbf16, #tpu.memory_space<vmem>>, vector<1x64x64xbf16>
    %99 = vector.shape_cast %98 : vector<1x64x64xbf16> to vector<64x64xbf16>
    %100 = arith.truncf %97 : vector<16x64xf32> to vector<16x64xbf16>
    %cst_34 = arith.constant dense<0.000000e+00> : vector<16x64xf32>
    %101 = tpu.matmul %100, %99, %cst_34 {dimension_numbers = #tpu.dot_dimension_numbers<[1], [0], [0], [1], [0, 0, 1, 1], [], []>} : vector<16x64xbf16>, vector<64x64xbf16>, vector<16x64xf32> -> vector<16x64xf32>
    %102 = arith.addf %11, %101 : vector<16x64xf32>
    %c0_35 = arith.constant 0 : index
    %c0_36 = arith.constant 0 : index
    %c0_37 = arith.constant 0 : index
    %103 = vector.load %arg9[%c0_35, %c0_36, %c0_37] : memref<2x1x64xf32, #tpu.memory_space<vmem>>, vector<1x1x64xf32>
    %104 = vector.shape_cast %103 : vector<1x1x64xf32> to vector<1x64xf32>
    %105 = arith.mulf %102, %102 : vector<16x64xf32>
    %cst_38 = arith.constant dense<0.000000e+00> : vector<16xf32>
    %106 = vector.multi_reduction <add>, %105, %cst_38 [1] : vector<16x64xf32> to vector<16xf32>
    %107 = vector.shape_cast %106 : vector<16xf32> to vector<16x1xf32>
    %cst_39 = arith.constant 6.400000e+01 : f32
    %108 = vector.broadcast %cst_39 : f32 to vector<16x1xf32>
    %109 = arith.divf %107, %108 : vector<16x1xf32>
    %cst_40 = arith.constant 9.99999974E-6 : f32
    %110 = vector.broadcast %cst_40 : f32 to vector<16x1xf32>
    %111 = arith.addf %109, %110 : vector<16x1xf32>
    %112 = math.rsqrt %111 : vector<16x1xf32>
    %113 = vector.broadcast %112 : vector<16x1xf32> to vector<16x64xf32>
    %114 = arith.mulf %102, %113 : vector<16x64xf32>
    %115 = vector.broadcast %104 : vector<1x64xf32> to vector<16x64xf32>
    %116 = arith.mulf %114, %115 : vector<16x64xf32>
    %c0_41 = arith.constant 0 : index
    %c0_42 = arith.constant 0 : index
    %c0_43 = arith.constant 0 : index
    %117 = vector.load %arg10[%c0_41, %c0_42, %c0_43] : memref<2x64x256xbf16, #tpu.memory_space<vmem>>, vector<1x64x256xbf16>
    %118 = vector.shape_cast %117 : vector<1x64x256xbf16> to vector<64x256xbf16>
    %119 = arith.truncf %116 : vector<16x64xf32> to vector<16x64xbf16>
    %cst_44 = arith.constant dense<0.000000e+00> : vector<16x256xf32>
    %120 = tpu.matmul %119, %118, %cst_44 {dimension_numbers = #tpu.dot_dimension_numbers<[1], [0], [0], [1], [0, 0, 1, 1], [], []>} : vector<16x64xbf16>, vector<64x256xbf16>, vector<16x256xf32> -> vector<16x256xf32>
    %121 = vector.extract_strided_slice %120 {offsets = [0, 0], sizes = [16, 128], strides = [1, 1]} : vector<16x256xf32> to vector<16x128xf32>
    %122 = vector.extract_strided_slice %120 {offsets = [0, 128], sizes = [16, 128], strides = [1, 1]} : vector<16x256xf32> to vector<16x128xf32>
    %cst_45 = arith.constant 0.000000e+00 : f32
    %123 = vector.broadcast %cst_45 : f32 to vector<16x128xf32>
    %124 = arith.subf %123, %121 : vector<16x128xf32>
    %125 = math.exp %124 : vector<16x128xf32>
    %cst_46 = arith.constant 1.000000e+00 : f32
    %126 = vector.broadcast %cst_46 : f32 to vector<16x128xf32>
    %127 = arith.addf %126, %125 : vector<16x128xf32>
    %128 = tpu.reciprocal %127 {approx = true} : vector<16x128xf32> -> vector<16x128xf32>
    %129 = arith.mulf %121, %128 : vector<16x128xf32>
    %130 = arith.mulf %129, %122 : vector<16x128xf32>
    %c0_47 = arith.constant 0 : index
    %c0_48 = arith.constant 0 : index
    %c0_49 = arith.constant 0 : index
    %131 = vector.load %arg11[%c0_47, %c0_48, %c0_49] : memref<2x128x64xbf16, #tpu.memory_space<vmem>>, vector<1x128x64xbf16>
    %132 = vector.shape_cast %131 : vector<1x128x64xbf16> to vector<128x64xbf16>
    %133 = arith.truncf %130 : vector<16x128xf32> to vector<16x128xbf16>
    %cst_50 = arith.constant dense<0.000000e+00> : vector<16x64xf32>
    %134 = tpu.matmul %133, %132, %cst_50 {dimension_numbers = #tpu.dot_dimension_numbers<[1], [0], [0], [1], [0, 0, 1, 1], [], []>} : vector<16x128xbf16>, vector<128x64xbf16>, vector<16x64xf32> -> vector<16x64xf32>
    %135 = arith.addf %102, %134 : vector<16x64xf32>
    %c1 = arith.constant 1 : index
    %c0_51 = arith.constant 0 : index
    %c0_52 = arith.constant 0 : index
    %136 = vector.load %arg6[%c1, %c0_51, %c0_52] : memref<2x1x64xf32, #tpu.memory_space<vmem>>, vector<1x1x64xf32>
    %137 = vector.shape_cast %136 : vector<1x1x64xf32> to vector<1x64xf32>
    %138 = arith.mulf %135, %135 : vector<16x64xf32>
    %cst_53 = arith.constant dense<0.000000e+00> : vector<16xf32>
    %139 = vector.multi_reduction <add>, %138, %cst_53 [1] : vector<16x64xf32> to vector<16xf32>
    %140 = vector.shape_cast %139 : vector<16xf32> to vector<16x1xf32>
    %cst_54 = arith.constant 6.400000e+01 : f32
    %141 = vector.broadcast %cst_54 : f32 to vector<16x1xf32>
    %142 = arith.divf %140, %141 : vector<16x1xf32>
    %cst_55 = arith.constant 9.99999974E-6 : f32
    %143 = vector.broadcast %cst_55 : f32 to vector<16x1xf32>
    %144 = arith.addf %142, %143 : vector<16x1xf32>
    %145 = math.rsqrt %144 : vector<16x1xf32>
    %146 = vector.broadcast %145 : vector<16x1xf32> to vector<16x64xf32>
    %147 = arith.mulf %135, %146 : vector<16x64xf32>
    %148 = vector.broadcast %137 : vector<1x64xf32> to vector<16x64xf32>
    %149 = arith.mulf %147, %148 : vector<16x64xf32>
    %c1_56 = arith.constant 1 : index
    %c0_57 = arith.constant 0 : index
    %c0_58 = arith.constant 0 : index
    %150 = vector.load %arg7[%c1_56, %c0_57, %c0_58] : memref<2x64x192xbf16, #tpu.memory_space<vmem>>, vector<1x64x192xbf16>
    %151 = vector.shape_cast %150 : vector<1x64x192xbf16> to vector<64x192xbf16>
    %152 = arith.truncf %149 : vector<16x64xf32> to vector<16x64xbf16>
    %cst_59 = arith.constant dense<0.000000e+00> : vector<16x192xf32>
    %153 = tpu.matmul %152, %151, %cst_59 {dimension_numbers = #tpu.dot_dimension_numbers<[1], [0], [0], [1], [0, 0, 1, 1], [], []>} : vector<16x64xbf16>, vector<64x192xbf16>, vector<16x192xf32> -> vector<16x192xf32>
    %154 = vector.extract_strided_slice %153 {offsets = [0, 0], sizes = [16, 64], strides = [1, 1]} : vector<16x192xf32> to vector<16x64xf32>
    %155 = vector.extract_strided_slice %154 {offsets = [0, 16], sizes = [16, 16], strides = [1, 1]} : vector<16x64xf32> to vector<16x16xf32>
    %cst_60 = arith.constant 0.000000e+00 : f32
    %156 = vector.broadcast %cst_60 : f32 to vector<16x16xf32>
    %157 = arith.subf %156, %155 : vector<16x16xf32>
    %158 = vector.extract_strided_slice %154 {offsets = [0, 0], sizes = [16, 16], strides = [1, 1]} : vector<16x64xf32> to vector<16x16xf32>
    %159 = vector.extract_strided_slice %154 {offsets = [0, 48], sizes = [16, 16], strides = [1, 1]} : vector<16x64xf32> to vector<16x16xf32>
    %cst_61 = arith.constant 0.000000e+00 : f32
    %160 = vector.broadcast %cst_61 : f32 to vector<16x16xf32>
    %161 = arith.subf %160, %159 : vector<16x16xf32>
    %162 = vector.extract_strided_slice %154 {offsets = [0, 32], sizes = [16, 16], strides = [1, 1]} : vector<16x64xf32> to vector<16x16xf32>
    %163 = tpu.concatenate %157, %158, %161, %162 in 1 : vector<16x16xf32>, vector<16x16xf32>, vector<16x16xf32>, vector<16x16xf32> -> vector<16x64xf32>
    %164 = arith.mulf %154, %0 : vector<16x64xf32>
    %165 = arith.mulf %163, %1 : vector<16x64xf32>
    %166 = arith.addf %164, %165 : vector<16x64xf32>
    %167 = vector.extract_strided_slice %153 {offsets = [0, 64], sizes = [16, 64], strides = [1, 1]} : vector<16x192xf32> to vector<16x64xf32>
    %168 = vector.extract_strided_slice %167 {offsets = [0, 16], sizes = [16, 16], strides = [1, 1]} : vector<16x64xf32> to vector<16x16xf32>
    %cst_62 = arith.constant 0.000000e+00 : f32
    %169 = vector.broadcast %cst_62 : f32 to vector<16x16xf32>
    %170 = arith.subf %169, %168 : vector<16x16xf32>
    %171 = vector.extract_strided_slice %167 {offsets = [0, 0], sizes = [16, 16], strides = [1, 1]} : vector<16x64xf32> to vector<16x16xf32>
    %172 = vector.extract_strided_slice %167 {offsets = [0, 48], sizes = [16, 16], strides = [1, 1]} : vector<16x64xf32> to vector<16x16xf32>
    %cst_63 = arith.constant 0.000000e+00 : f32
    %173 = vector.broadcast %cst_63 : f32 to vector<16x16xf32>
    %174 = arith.subf %173, %172 : vector<16x16xf32>
    %175 = vector.extract_strided_slice %167 {offsets = [0, 32], sizes = [16, 16], strides = [1, 1]} : vector<16x64xf32> to vector<16x16xf32>
    %176 = tpu.concatenate %170, %171, %174, %175 in 1 : vector<16x16xf32>, vector<16x16xf32>, vector<16x16xf32>, vector<16x16xf32> -> vector<16x64xf32>
    %177 = arith.mulf %167, %0 : vector<16x64xf32>
    %178 = arith.mulf %176, %1 : vector<16x64xf32>
    %179 = arith.addf %177, %178 : vector<16x64xf32>
    %180 = vector.extract_strided_slice %153 {offsets = [0, 128], sizes = [16, 64], strides = [1, 1]} : vector<16x192xf32> to vector<16x64xf32>
    %181 = vector.extract_strided_slice %166 {offsets = [0, 0], sizes = [16, 32], strides = [1, 1]} : vector<16x64xf32> to vector<16x32xf32>
    %182 = vector.extract_strided_slice %179 {offsets = [0, 0], sizes = [16, 32], strides = [1, 1]} : vector<16x64xf32> to vector<16x32xf32>
    %183 = vector.extract_strided_slice %180 {offsets = [0, 0], sizes = [16, 32], strides = [1, 1]} : vector<16x64xf32> to vector<16x32xf32>
    %184 = arith.truncf %181 : vector<16x32xf32> to vector<16x32xbf16>
    %185 = arith.truncf %182 : vector<16x32xf32> to vector<16x32xbf16>
    %cst_64 = arith.constant dense<0.000000e+00> : vector<16x16xf32>
    %186 = tpu.matmul %184, %185, %cst_64 {dimension_numbers = #tpu.dot_dimension_numbers<[1], [1], [0], [0], [0, 0, 1, 0], [], []>} : vector<16x32xbf16>, vector<16x32xbf16>, vector<16x16xf32> -> vector<16x16xf32>
    %187 = arith.addf %186, %2 : vector<16x16xf32>
    %cst_65 = arith.constant dense<0xFF800000> : vector<16xf32>
    %188 = vector.multi_reduction <maximumf>, %187, %cst_65 [1] : vector<16x16xf32> to vector<16xf32>
    %189 = vector.shape_cast %188 : vector<16xf32> to vector<16x1xf32>
    %190 = vector.broadcast %189 : vector<16x1xf32> to vector<16x16xf32>
    %191 = arith.subf %187, %190 : vector<16x16xf32>
    %192 = math.exp %191 : vector<16x16xf32>
    %cst_66 = arith.constant dense<0.000000e+00> : vector<16xf32>
    %193 = vector.multi_reduction <add>, %192, %cst_66 [1] : vector<16x16xf32> to vector<16xf32>
    %194 = vector.shape_cast %193 : vector<16xf32> to vector<16x1xf32>
    %195 = tpu.reciprocal %194 {approx = true} : vector<16x1xf32> -> vector<16x1xf32>
    %196 = vector.broadcast %195 : vector<16x1xf32> to vector<16x16xf32>
    %197 = arith.mulf %192, %196 : vector<16x16xf32>
    %198 = arith.truncf %197 : vector<16x16xf32> to vector<16x16xbf16>
    %199 = arith.truncf %183 : vector<16x32xf32> to vector<16x32xbf16>
    %cst_67 = arith.constant dense<0.000000e+00> : vector<16x32xf32>
    %200 = tpu.matmul %198, %199, %cst_67 {dimension_numbers = #tpu.dot_dimension_numbers<[1], [0], [0], [1], [0, 0, 1, 1], [], []>} : vector<16x16xbf16>, vector<16x32xbf16>, vector<16x32xf32> -> vector<16x32xf32>
    %201 = vector.extract_strided_slice %166 {offsets = [0, 32], sizes = [16, 32], strides = [1, 1]} : vector<16x64xf32> to vector<16x32xf32>
    %202 = vector.extract_strided_slice %179 {offsets = [0, 32], sizes = [16, 32], strides = [1, 1]} : vector<16x64xf32> to vector<16x32xf32>
    %203 = vector.extract_strided_slice %180 {offsets = [0, 32], sizes = [16, 32], strides = [1, 1]} : vector<16x64xf32> to vector<16x32xf32>
    %204 = arith.truncf %201 : vector<16x32xf32> to vector<16x32xbf16>
    %205 = arith.truncf %202 : vector<16x32xf32> to vector<16x32xbf16>
    %cst_68 = arith.constant dense<0.000000e+00> : vector<16x16xf32>
    %206 = tpu.matmul %204, %205, %cst_68 {dimension_numbers = #tpu.dot_dimension_numbers<[1], [1], [0], [0], [0, 0, 1, 0], [], []>} : vector<16x32xbf16>, vector<16x32xbf16>, vector<16x16xf32> -> vector<16x16xf32>
    %207 = arith.addf %206, %2 : vector<16x16xf32>
    %cst_69 = arith.constant dense<0xFF800000> : vector<16xf32>
    %208 = vector.multi_reduction <maximumf>, %207, %cst_69 [1] : vector<16x16xf32> to vector<16xf32>
    %209 = vector.shape_cast %208 : vector<16xf32> to vector<16x1xf32>
    %210 = vector.broadcast %209 : vector<16x1xf32> to vector<16x16xf32>
    %211 = arith.subf %207, %210 : vector<16x16xf32>
    %212 = math.exp %211 : vector<16x16xf32>
    %cst_70 = arith.constant dense<0.000000e+00> : vector<16xf32>
    %213 = vector.multi_reduction <add>, %212, %cst_70 [1] : vector<16x16xf32> to vector<16xf32>
    %214 = vector.shape_cast %213 : vector<16xf32> to vector<16x1xf32>
    %215 = tpu.reciprocal %214 {approx = true} : vector<16x1xf32> -> vector<16x1xf32>
    %216 = vector.broadcast %215 : vector<16x1xf32> to vector<16x16xf32>
    %217 = arith.mulf %212, %216 : vector<16x16xf32>
    %218 = arith.truncf %217 : vector<16x16xf32> to vector<16x16xbf16>
    %219 = arith.truncf %203 : vector<16x32xf32> to vector<16x32xbf16>
    %cst_71 = arith.constant dense<0.000000e+00> : vector<16x32xf32>
    %220 = tpu.matmul %218, %219, %cst_71 {dimension_numbers = #tpu.dot_dimension_numbers<[1], [0], [0], [1], [0, 0, 1, 1], [], []>} : vector<16x16xbf16>, vector<16x32xbf16>, vector<16x32xf32> -> vector<16x32xf32>
    %221 = tpu.concatenate %200, %220 in 1 : vector<16x32xf32>, vector<16x32xf32> -> vector<16x64xf32>
    %c1_72 = arith.constant 1 : index
    %c0_73 = arith.constant 0 : index
    %c0_74 = arith.constant 0 : index
    %222 = vector.load %arg8[%c1_72, %c0_73, %c0_74] : memref<2x64x64xbf16, #tpu.memory_space<vmem>>, vector<1x64x64xbf16>
    %223 = vector.shape_cast %222 : vector<1x64x64xbf16> to vector<64x64xbf16>
    %224 = arith.truncf %221 : vector<16x64xf32> to vector<16x64xbf16>
    %cst_75 = arith.constant dense<0.000000e+00> : vector<16x64xf32>
    %225 = tpu.matmul %224, %223, %cst_75 {dimension_numbers = #tpu.dot_dimension_numbers<[1], [0], [0], [1], [0, 0, 1, 1], [], []>} : vector<16x64xbf16>, vector<64x64xbf16>, vector<16x64xf32> -> vector<16x64xf32>
    %226 = arith.addf %135, %225 : vector<16x64xf32>
    %c1_76 = arith.constant 1 : index
    %c0_77 = arith.constant 0 : index
    %c0_78 = arith.constant 0 : index
    %227 = vector.load %arg9[%c1_76, %c0_77, %c0_78] : memref<2x1x64xf32, #tpu.memory_space<vmem>>, vector<1x1x64xf32>
    %228 = vector.shape_cast %227 : vector<1x1x64xf32> to vector<1x64xf32>
    %229 = arith.mulf %226, %226 : vector<16x64xf32>
    %cst_79 = arith.constant dense<0.000000e+00> : vector<16xf32>
    %230 = vector.multi_reduction <add>, %229, %cst_79 [1] : vector<16x64xf32> to vector<16xf32>
    %231 = vector.shape_cast %230 : vector<16xf32> to vector<16x1xf32>
    %cst_80 = arith.constant 6.400000e+01 : f32
    %232 = vector.broadcast %cst_80 : f32 to vector<16x1xf32>
    %233 = arith.divf %231, %232 : vector<16x1xf32>
    %cst_81 = arith.constant 9.99999974E-6 : f32
    %234 = vector.broadcast %cst_81 : f32 to vector<16x1xf32>
    %235 = arith.addf %233, %234 : vector<16x1xf32>
    %236 = math.rsqrt %235 : vector<16x1xf32>
    %237 = vector.broadcast %236 : vector<16x1xf32> to vector<16x64xf32>
    %238 = arith.mulf %226, %237 : vector<16x64xf32>
    %239 = vector.broadcast %228 : vector<1x64xf32> to vector<16x64xf32>
    %240 = arith.mulf %238, %239 : vector<16x64xf32>
    %c1_82 = arith.constant 1 : index
    %c0_83 = arith.constant 0 : index
    %c0_84 = arith.constant 0 : index
    %241 = vector.load %arg10[%c1_82, %c0_83, %c0_84] : memref<2x64x256xbf16, #tpu.memory_space<vmem>>, vector<1x64x256xbf16>
    %242 = vector.shape_cast %241 : vector<1x64x256xbf16> to vector<64x256xbf16>
    %243 = arith.truncf %240 : vector<16x64xf32> to vector<16x64xbf16>
    %cst_85 = arith.constant dense<0.000000e+00> : vector<16x256xf32>
    %244 = tpu.matmul %243, %242, %cst_85 {dimension_numbers = #tpu.dot_dimension_numbers<[1], [0], [0], [1], [0, 0, 1, 1], [], []>} : vector<16x64xbf16>, vector<64x256xbf16>, vector<16x256xf32> -> vector<16x256xf32>
    %245 = vector.extract_strided_slice %244 {offsets = [0, 0], sizes = [16, 128], strides = [1, 1]} : vector<16x256xf32> to vector<16x128xf32>
    %246 = vector.extract_strided_slice %244 {offsets = [0, 128], sizes = [16, 128], strides = [1, 1]} : vector<16x256xf32> to vector<16x128xf32>
    %cst_86 = arith.constant 0.000000e+00 : f32
    %247 = vector.broadcast %cst_86 : f32 to vector<16x128xf32>
    %248 = arith.subf %247, %245 : vector<16x128xf32>
    %249 = math.exp %248 : vector<16x128xf32>
    %cst_87 = arith.constant 1.000000e+00 : f32
    %250 = vector.broadcast %cst_87 : f32 to vector<16x128xf32>
    %251 = arith.addf %250, %249 : vector<16x128xf32>
    %252 = tpu.reciprocal %251 {approx = true} : vector<16x128xf32> -> vector<16x128xf32>
    %253 = arith.mulf %245, %252 : vector<16x128xf32>
    %254 = arith.mulf %253, %246 : vector<16x128xf32>
    %c1_88 = arith.constant 1 : index
    %c0_89 = arith.constant 0 : index
    %c0_90 = arith.constant 0 : index
    %255 = vector.load %arg11[%c1_88, %c0_89, %c0_90] : memref<2x128x64xbf16, #tpu.memory_space<vmem>>, vector<1x128x64xbf16>
    %256 = vector.shape_cast %255 : vector<1x128x64xbf16> to vector<128x64xbf16>
    %257 = arith.truncf %254 : vector<16x128xf32> to vector<16x128xbf16>
    %cst_91 = arith.constant dense<0.000000e+00> : vector<16x64xf32>
    %258 = tpu.matmul %257, %256, %cst_91 {dimension_numbers = #tpu.dot_dimension_numbers<[1], [0], [0], [1], [0, 0, 1, 1], [], []>} : vector<16x128xbf16>, vector<128x64xbf16>, vector<16x64xf32> -> vector<16x64xf32>
    %259 = arith.addf %226, %258 : vector<16x64xf32>
    %c0_92 = arith.constant 0 : index
    %c0_93 = arith.constant 0 : index
    %260 = vector.load %arg12[%c0_92, %c0_93] : memref<1x64xf32, #tpu.memory_space<vmem>>, vector<1x64xf32>
    %261 = arith.mulf %259, %259 : vector<16x64xf32>
    %cst_94 = arith.constant dense<0.000000e+00> : vector<16xf32>
    %262 = vector.multi_reduction <add>, %261, %cst_94 [1] : vector<16x64xf32> to vector<16xf32>
    %263 = vector.shape_cast %262 : vector<16xf32> to vector<16x1xf32>
    %cst_95 = arith.constant 6.400000e+01 : f32
    %264 = vector.broadcast %cst_95 : f32 to vector<16x1xf32>
    %265 = arith.divf %263, %264 : vector<16x1xf32>
    %cst_96 = arith.constant 9.99999974E-6 : f32
    %266 = vector.broadcast %cst_96 : f32 to vector<16x1xf32>
    %267 = arith.addf %265, %266 : vector<16x1xf32>
    %268 = math.rsqrt %267 : vector<16x1xf32>
    %269 = vector.broadcast %268 : vector<16x1xf32> to vector<16x64xf32>
    %270 = arith.mulf %259, %269 : vector<16x64xf32>
    %271 = vector.broadcast %260 : vector<1x64xf32> to vector<16x64xf32>
    %272 = arith.mulf %270, %271 : vector<16x64xf32>
    %c0_97 = arith.constant 0 : index
    %c0_98 = arith.constant 0 : index
    %273 = vector.load %arg5[%c0_97, %c0_98] : memref<64x256xbf16, #tpu.memory_space<vmem>>, vector<64x256xbf16>
    %274 = arith.truncf %272 : vector<16x64xf32> to vector<16x64xbf16>
    %cst_99 = arith.constant dense<0.000000e+00> : vector<16x256xf32>
    %275 = tpu.matmul %274, %273, %cst_99 {dimension_numbers = #tpu.dot_dimension_numbers<[1], [0], [0], [1], [0, 0, 1, 1], [], []>} : vector<16x64xbf16>, vector<64x256xbf16>, vector<16x256xf32> -> vector<16x256xf32>
    %c0_100 = arith.constant 0 : index
    %c0_101 = arith.constant 0 : index
    %276 = vector.load %arg13[%c0_100, %c0_101] : memref<16x256xf32, #tpu.memory_space<vmem>>, vector<16x256xf32>
    tpu.vector_store %arg13[%c0_100, %c0_101], %275 {strides = array<i32>} : memref<16x256xf32, #tpu.memory_space<vmem>>, vector<16x256xf32>,
    return
  }
}

</mosaic_0001>

<llo_original>
// kernel: smollm_forward.1
$region0: #{smollm_forward.1}
  #allocation0 [shape = 'u32[]', space=smem, size = 0x4, offset = 0x4, fixed_abs, tag = 'smem constant byte address 0x4 - core index']
  #allocation1 [shape = 'u32[144,128]{1,0:T(1,128)}', space=vmem, size = 0x12000, scoped, tag = 'internal scratch']
  %s0 = inlined_call_operand.vmem [shape: s32[16,1], index: 0, kind: input, shape index: {}]
  %s1 = inlined_call_operand.vmem [shape: f32[16,16], index: 1, kind: input, shape index: {}]
  %s2 = inlined_call_operand.vmem [shape: f32[16,64], index: 2, kind: input, shape index: {}]
  %s3 = inlined_call_operand.vmem [shape: f32[16,64], index: 3, kind: input, shape index: {}]
  %s4 = inlined_call_operand.vmem [shape: bf16[256,64], index: 4, kind: input, shape index: {}]
  %s5 = inlined_call_operand.vmem [shape: bf16[64,256], index: 5, kind: input, shape index: {}]
  %s6 = inlined_call_operand.vmem [shape: f32[2,1,64], index: 6, kind: input, shape index: {}]
  %s7 = inlined_call_operand.vmem [shape: bf16[2,64,192], index: 7, kind: input, shape index: {}]
  %s8 = inlined_call_operand.vmem [shape: bf16[2,64,64], index: 8, kind: input, shape index: {}]
  %s9 = inlined_call_operand.vmem [shape: f32[2,1,64], index: 9, kind: input, shape index: {}]
  %s10 = inlined_call_operand.vmem [shape: bf16[2,64,256], index: 10, kind: input, shape index: {}]
  %s11 = inlined_call_operand.vmem [shape: bf16[2,128,64], index: 11, kind: input, shape index: {}]
  %s12 = inlined_call_operand.vmem [shape: f32[1,64], index: 12, kind: input, shape index: {}]
  %s13 = inlined_call_operand.hbm [shape: f32[16,256], index: 13, kind: output, shape index: {}]
  %s14 = sld [smem:[#allocation0]]
  $region62: #{smollm_forward.1} parent=0
    _
  %s16 = ssub.s32 1, %s14
  %s17 = scalar_select 0, %s16, %s14
  $region1: #{smollm_forward.1} parent=0
    #allocation2 [shape = 'u8[16384]{0}', space=vmem, size = 0x4000, scoped, tag = 'output window, operand 0, single buffered']
    #allocation3 [shape = 's32[1]{0}', space=sflag, size = 0x4, scoped, tag = 'scoped memory for smollm_forward.1']
    %18 = vsyncpa [#allocation3], 0
    // Predicated region
    $region2: #{smollm_forward.1} parent=1 // pred_check
      _
    $region3: #{smollm_forward.1} parent=1 // pred_check_branch
      %20 = sbr.rel (0) target = $region5
    $region4: #{smollm_forward.1} parent=1 // pred_region
      _
    $region5: #{smollm_forward.1} parent=1 // pred_fallthru
      _
    // Predicated region
    $region6: #{smollm_forward.1} parent=1 // pred_check
      _
    $region7: #{smollm_forward.1} parent=1 // pred_check_branch
      %22 = sbr.rel (0) target = $region9
    $region8: #{smollm_forward.1} parent=1 // pred_region
      _
    $region9: #{smollm_forward.1} parent=1 // pred_fallthru
      _
    // Predicated region
    $region10: #{smollm_forward.1} parent=1 // pred_check
      _
    $region11: #{smollm_forward.1} parent=1 // pred_check_branch
      %24 = sbr.rel (0) target = $region13
    $region12: #{smollm_forward.1} parent=1 // pred_region
      _
    $region13: #{smollm_forward.1} parent=1 // pred_fallthru
      _
    // Predicated region
    $region14: #{smollm_forward.1} parent=1 // pred_check
      _
    $region15: #{smollm_forward.1} parent=1 // pred_check_branch
      %26 = sbr.rel (0) target = $region17
    $region16: #{smollm_forward.1} parent=1 // pred_region
      _
    $region17: #{smollm_forward.1} parent=1 // pred_fallthru
      _
    // Predicated region
    $region18: #{smollm_forward.1} parent=1 // pred_check
      _
    $region19: #{smollm_forward.1} parent=1 // pred_check_branch
      %28 = sbr.rel (0) target = $region21
    $region20: #{smollm_forward.1} parent=1 // pred_region
      _
    $region21: #{smollm_forward.1} parent=1 // pred_fallthru
      _
    // Predicated region
    $region22: #{smollm_forward.1} parent=1 // pred_check
      _
    $region23: #{smollm_forward.1} parent=1 // pred_check_branch
      %30 = sbr.rel (0) target = $region25
    $region24: #{smollm_forward.1} parent=1 // pred_region
      _
    $region25: #{smollm_forward.1} parent=1 // pred_fallthru
      _
    // Predicated region
    $region26: #{smollm_forward.1} parent=1 // pred_check
      _
    $region27: #{smollm_forward.1} parent=1 // pred_check_branch
      %32 = sbr.rel (0) target = $region29
    $region28: #{smollm_forward.1} parent=1 // pred_region
      _
    $region29: #{smollm_forward.1} parent=1 // pred_fallthru
      _
    // Predicated region
    $region30: #{smollm_forward.1} parent=1 // pred_check
      _
    $region31: #{smollm_forward.1} parent=1 // pred_check_branch
      %34 = sbr.rel (0) target = $region33
    $region32: #{smollm_forward.1} parent=1 // pred_region
      _
    $region33: #{smollm_forward.1} parent=1 // pred_fallthru
      _
    // Predicated region
    $region34: #{smollm_forward.1} parent=1 // pred_check
      _
    $region35: #{smollm_forward.1} parent=1 // pred_check_branch
      %36 = sbr.rel (0) target = $region37
    $region36: #{smollm_forward.1} parent=1 // pred_region
      _
    $region37: #{smollm_forward.1} parent=1 // pred_fallthru
      _
    // Predicated region
    $region38: #{smollm_forward.1} parent=1 // pred_check
      _
    $region39: #{smollm_forward.1} parent=1 // pred_check_branch
      %38 = sbr.rel (0) target = $region41
    $region40: #{smollm_forward.1} parent=1 // pred_region
      _
    $region41: #{smollm_forward.1} parent=1 // pred_fallthru
      _
    // Predicated region
    $region42: #{smollm_forward.1} parent=1 // pred_check
      _
    $region43: #{smollm_forward.1} parent=1 // pred_check_branch
      %40 = sbr.rel (0) target = $region45
    $region44: #{smollm_forward.1} parent=1 // pred_region
      _
    $region45: #{smollm_forward.1} parent=1 // pred_fallthru
      _
    // Predicated region
    $region46: #{smollm_forward.1} parent=1 // pred_check
      _
    $region47: #{smollm_forward.1} parent=1 // pred_check_branch
      %42 = sbr.rel (0) target = $region49
    $region48: #{smollm_forward.1} parent=1 // pred_region
      _
    $region49: #{smollm_forward.1} parent=1 // pred_fallthru
      _
    // Predicated region
    $region50: #{smollm_forward.1} parent=1 // pred_check
      _
    $region51: #{smollm_forward.1} parent=1 // pred_check_branch
      %44 = sbr.rel (0) target = $region53
    $region52: #{smollm_forward.1} parent=1 // pred_region
      _
    $region53: #{smollm_forward.1} parent=1 // pred_fallthru
      _
    %v46 = vld [vmem:[%s2] sm:$0xff]
    %v47 = vld [vmem:[%s2 + $0x8] sm:$0xff]
    %v48 = vld [vmem:[%s3] sm:$0xff]
    %v49 = vld [vmem:[%s3 + $0x8] sm:$0xff]
    %v50 = vld [vmem:[%s1] sm:$0xff]
    %v51 = vld [vmem:[%s1 + $0x8] sm:$0xff]
    %v52 = vld [vmem:[%s0] sm:$0xff]
    %v53 = vld [vmem:[%s0 + $0x8] sm:$0xff]
    %v54 = vlaneseq
    %v55 = vand.u32 %v54, 127
    %v56 = vadd.s32 %v55, 128
    %57 = vset.pattern.permute.xlu0 0
    %58 = vperm.xlu0 %57, %v52
    %v59 = vpop.permute.xlu0 %58
    %60 = vset.pattern.permute.xlu0 0
    %61 = vperm.xlu0 %60, %v53
    %v62 = vpop.permute.xlu0 %61
    %vm63 = vcmp.eq.s32.totalorder %v59, %v55
    %vm64 = vcmp.eq.s32.totalorder %v59, %v56
    %vm65 = vcmp.eq.s32.totalorder %v62, %v55
    %vm66 = vcmp.eq.s32.totalorder %v62, %v56
    %v67 = vld [vmem:[%s4] sm:$0xf]
    %v68 = vld [vmem:[%s4 + $0x4] sm:$0xf]
    %v69 = vld [vmem:[%s4 + $0x8] sm:$0xf]
    %v70 = vld [vmem:[%s4 + $0xc] sm:$0xf]
    %v71 = vld [vmem:[%s4 + $0x10] sm:$0xf]
    %v72 = vld [vmem:[%s4 + $0x14] sm:$0xf]
    %v73 = vld [vmem:[%s4 + $0x18] sm:$0xf]
    %v74 = vld [vmem:[%s4 + $0x1c] sm:$0xf]
    %v75 = vld [vmem:[%s4 + $0x20] sm:$0xf]
    %v76 = vld [vmem:[%s4 + $0x24] sm:$0xf]
    %v77 = vld [vmem:[%s4 + $0x28] sm:$0xf]
    %v78 = vld [vmem:[%s4 + $0x2c] sm:$0xf]
    %v79 = vld [vmem:[%s4 + $0x30] sm:$0xf]
    %v80 = vld [vmem:[%s4 + $0x34] sm:$0xf]
    %v81 = vld [vmem:[%s4 + $0x38] sm:$0xf]
    %v82 = vld [vmem:[%s4 + $0x3c] sm:$0xf]
    %v83 = vld [vmem:[%s4 + $0x40] sm:$0xf]
    %v84 = vld [vmem:[%s4 + $0x44] sm:$0xf]
    %v85 = vld [vmem:[%s4 + $0x48] sm:$0xf]
    %v86 = vld [vmem:[%s4 + $0x4c] sm:$0xf]
    %v87 = vld [vmem:[%s4 + $0x50] sm:$0xf]
    %v88 = vld [vmem:[%s4 + $0x54] sm:$0xf]
    %v89 = vld [vmem:[%s4 + $0x58] sm:$0xf]
    %v90 = vld [vmem:[%s4 + $0x5c] sm:$0xf]
    %v91 = vld [vmem:[%s4 + $0x60] sm:$0xf]
    %v92 = vld [vmem:[%s4 + $0x64] sm:$0xf]
    %v93 = vld [vmem:[%s4 + $0x68] sm:$0xf]
    %v94 = vld [vmem:[%s4 + $0x6c] sm:$0xf]
    %v95 = vld [vmem:[%s4 + $0x70] sm:$0xf]
    %v96 = vld [vmem:[%s4 + $0x74] sm:$0xf]
    %v97 = vld [vmem:[%s4 + $0x78] sm:$0xf]
    %v98 = vld [vmem:[%s4 + $0x7c] sm:$0xf]
    %v99 = vsel %vm63, 1, 0
    %v100 = vsel %vm64, 1, 0
    %v101 = vsel %vm65, 1, 0
    %v102 = vsel %vm66, 1, 0
    %v103 = vcvt.s32.f32 %v99
    %v104 = vcvt.s32.f32 %v100
    %v105 = vcvt.s32.f32 %v101
    %v106 = vcvt.s32.f32 %v102
    %v107 = vpack.c.bf16 %v105, %v103
    %v108 = vpack.c.bf16 %v106, %v104
    %v141 = vunpack.c.l.b16 %v67
    %v142 = vunpack.c.l.b16 %v68
    %v143 = vunpack.c.l.b16 %v69
    %v144 = vunpack.c.l.b16 %v70
    %v145 = vunpack.c.l.b16 %v71
    %v146 = vunpack.c.l.b16 %v72
    %v147 = vunpack.c.l.b16 %v73
    %v148 = vunpack.c.l.b16 %v74
    %v149 = vunpack.c.l.b16 %v75
    %v150 = vunpack.c.l.b16 %v76
    %v151 = vunpack.c.l.b16 %v77
    %v152 = vunpack.c.l.b16 %v78
    %v153 = vunpack.c.l.b16 %v79
    %v154 = vunpack.c.l.b16 %v80
    %v155 = vunpack.c.l.b16 %v81
    %v156 = vunpack.c.l.b16 %v82
    %v157 = vunpack.c.l.b16 %v83
    %v158 = vunpack.c.l.b16 %v84
    %v159 = vunpack.c.l.b16 %v85
    %v160 = vunpack.c.l.b16 %v86
    %v161 = vunpack.c.l.b16 %v87
    %v162 = vunpack.c.l.b16 %v88
    %v163 = vunpack.c.l.b16 %v89
    %v164 = vunpack.c.l.b16 %v90
    %v165 = vunpack.c.l.b16 %v91
    %v166 = vunpack.c.l.b16 %v92
    %v167 = vunpack.c.l.b16 %v93
    %v168 = vunpack.c.l.b16 %v94
    %v169 = vunpack.c.l.b16 %v95
    %v170 = vunpack.c.l.b16 %v96
    %v171 = vunpack.c.l.b16 %v97
    %v172 = vunpack.c.l.b16 %v98
    %v173 = vpack.c.b16 %v142, %v141
    %v174 = vpack.c.b16 %v144, %v143
    %v175 = vpack.c.b16 %v146, %v145
    %v176 = vpack.c.b16 %v148, %v147
    %v177 = vpack.c.b16 %v150, %v149
    %v178 = vpack.c.b16 %v152, %v151
    %v179 = vpack.c.b16 %v154, %v153
    %v180 = vpack.c.b16 %v156, %v155
    %v181 = vpack.c.b16 %v158, %v157
    %v182 = vpack.c.b16 %v160, %v159
    %v183 = vpack.c.b16 %v162, %v161
    %v184 = vpack.c.b16 %v164, %v163
    %v185 = vpack.c.b16 %v166, %v165
    %v186 = vpack.c.b16 %v168, %v167
    %v187 = vpack.c.b16 %v170, %v169
    %v188 = vpack.c.b16 %v172, %v171
    %205 = vmatprep.subr.bf16.mxu0 0
    %206 = vmatpush1.bf16.msra.mxu0 %v180
    %207 = vmatprep.subr.bf16.mxu0 0
    %208 = vmatpush1.bf16.msra.mxu0 %v179
    %209 = vmatprep.subr.bf16.mxu0 0
    %210 = vmatpush1.bf16.msra.mxu0 %v178
    %211 = vmatprep.subr.bf16.mxu0 0
    %212 = vmatpush1.bf16.msra.mxu0 %v177
    %213 = vmatprep.subr.bf16.mxu0 0
    %214 = vmatpush1.bf16.msra.mxu0 %v176
    %215 = vmatprep.subr.bf16.mxu0 0
    %216 = vmatpush1.bf16.msra.mxu0 %v175
    %217 = vmatprep.subr.bf16.mxu0 0
    %218 = vmatpush1.bf16.msra.mxu0 %v174
    %219 = vmatprep.subr.bf16.mxu0 0
    %220 = vmatpush1.bf16.msra.mxu0 %v173
    %221 = vmatprep.subr.bf16.mxu0 0
    %222 = vmatpush2.bf16.msra.mxu0 %v188
    %223 = vmatprep.subr.bf16.mxu0 0
    %224 = vmatpush2.bf16.msra.mxu0 %v187
    %225 = vmatprep.subr.bf16.mxu0 0
    %226 = vmatpush2.bf16.msra.mxu0 %v186
    %227 = vmatprep.subr.bf16.mxu0 0
    %228 = vmatpush2.bf16.msra.mxu0 %v185
    %229 = vmatprep.subr.bf16.mxu0 0
    %230 = vmatpush2.bf16.msra.mxu0 %v184
    %231 = vmatprep.subr.bf16.mxu0 0
    %232 = vmatpush2.bf16.msra.mxu0 %v183
    %233 = vmatprep.subr.bf16.mxu0 0
    %234 = vmatpush2.bf16.msra.mxu0 %v182
    %235 = vmatprep.subr.bf16.mxu0 0
    %236 = vmatpush2.bf16.msra.mxu0 %v181
    %237 = vmatprep.mubr.bf16.mxu0 %v108
    %238 = vmatmul.mubr.bf16.gmra.mxu0 %v107
    %v239 = vpop.f32.mrf.mxu0
    %v240 = vadd.f32 0.0, %v239
    %v241 = vpop.f32.mrf.mxu0
    %v242 = vpop.f32.mrf.mxu0
    %v243 = vadd.f32 0.0, %v242
    %v244 = vpop.f32.mrf.mxu0
    %245 = vdwg.mxu0
    %v246 = vld [vmem:[%s6] sm:$0x1]
    %v247 = vmul.f32 %v240, %v240
    %v248 = vmul.f32 %v243, %v243
    %vm249 = vcmask 523264
    %v250 = vsel %vm249, %v247, 0.0
    %251 = vadd.xlane.f32.xlu0 %v250
    %v252 = vpop.xlane.xlu0 %251
    %v253 = vsel %vm249, %v248, 0.0
    %254 = vadd.xlane.f32.xlu0 %v253
    %v255 = vpop.xlane.xlu0 %254
    %v256 = vrcp.pop 64.0
    %v257 = vmul.f32 %v252, %v256
    %v258 = vmul.f32 %v255, %v256
    %v259 = vadd.f32 %v257, 1e-05
    %v260 = vadd.f32 %v258, 1e-05
    %v261 = vrsqrt.pop %v259
    %v262 = vrsqrt.pop %v260
    %v263 = vmul.f32 %v240, %v261
    %v264 = vmul.f32 %v243, %v262
    %v266 = vlaneseq
    %v267 = vshrl.u32 %v266, 7
    %v268 = vsub.s32 0, %v267
    %v269 = vrot.slane %v246, %v268
    %v271 = vmul.f32 %v263, %v269
    %v272 = vmul.f32 %v264, %v269
    %v273 = vld [vmem:[%s7] sm:$0xff]
    %v274 = vld [vmem:[%s7 + $0x8] sm:$0xff]
    %v275 = vld [vmem:[%s7 + $0x10] sm:$0xff]
    %v276 = vld [vmem:[%s7 + $0x18] sm:$0xff]
    %v277 = vld [vmem:[%s7 + $0x20] sm:$0xff]
    %v278 = vld [vmem:[%s7 + $0x28] sm:$0xff]
    %v279 = vld [vmem:[%s7 + $0x30] sm:$0xff]
    %v280 = vld [vmem:[%s7 + $0x38] sm:$0xff]
    %v281 = vpack.c.bf16 %v272, %v271
    %v290 = vunpack.c.l.b16 %v273
    %v291 = vunpack.c.h.b16 %v273
    %v292 = vunpack.c.l.b16 %v274
    %v293 = vunpack.c.h.b16 %v274
    %v294 = vunpack.c.l.b16 %v275
    %v295 = vunpack.c.h.b16 %v275
    %v296 = vunpack.c.l.b16 %v276
    %v297 = vunpack.c.h.b16 %v276
    %v298 = vunpack.c.l.b16 %v277
    %v299 = vunpack.c.h.b16 %v277
    %v300 = vunpack.c.l.b16 %v278
    %v301 = vunpack.c.h.b16 %v278
    %v302 = vunpack.c.l.b16 %v279
    %v303 = vunpack.c.h.b16 %v279
    %v304 = vunpack.c.l.b16 %v280
    %v305 = vunpack.c.h.b16 %v280
    %v306 = vpack.c.b16 %v292, %v290
    %v307 = vpack.c.b16 %v293, %v291
    %v308 = vpack.c.b16 %v296, %v294
    %v309 = vpack.c.b16 %v297, %v295
    %v310 = vpack.c.b16 %v300, %v298
    %v311 = vpack.c.b16 %v301, %v299
    %v312 = vpack.c.b16 %v304, %v302
    %v313 = vpack.c.b16 %v305, %v303
    %v323 = vsel %vm249, %v281, 0
    %325 = vmatprep.subr.bf16.mxu0 0
    %326 = vmatpush1.bf16.msra.mxu0 0
    %327 = vmatprep.subr.bf16.mxu0 0
    %328 = vmatpush1.bf16.msra.mxu0 0
    %329 = vmatprep.subr.bf16.mxu0 0
    %330 = vmatpush1.bf16.msra.mxu0 0
    %331 = vmatprep.subr.bf16.mxu0 0
    %332 = vmatpush1.bf16.msra.mxu0 0
    %333 = vmatprep.subr.bf16.mxu0 %v313
    %334 = vmatpush1.bf16.msra.mxu0 %v312
    %335 = vmatprep.subr.bf16.mxu0 %v311
    %336 = vmatpush1.bf16.msra.mxu0 %v310
    %337 = vmatprep.subr.bf16.mxu0 %v309
    %338 = vmatpush1.bf16.msra.mxu0 %v308
    %339 = vmatprep.subr.bf16.mxu0 %v307
    %340 = vmatpush1.bf16.msra.mxu0 %v306
    %341 = vmatprep.subr.bf16.mxu0 0
    %342 = vmatpush2.bf16.msra.mxu0 0
    %343 = vmatprep.subr.bf16.mxu0 0
    %344 = vmatpush2.bf16.msra.mxu0 0
    %345 = vmatprep.subr.bf16.mxu0 0
    %346 = vmatpush2.bf16.msra.mxu0 0
    %347 = vmatprep.subr.bf16.mxu0 0
    %348 = vmatpush2.bf16.msra.mxu0 0
    %349 = vmatprep.subr.bf16.mxu0 0
    %350 = vmatpush2.bf16.msra.mxu0 0
    %351 = vmatprep.subr.bf16.mxu0 0
    %352 = vmatpush2.bf16.msra.mxu0 0
    %353 = vmatprep.subr.bf16.mxu0 0
    %354 = vmatpush2.bf16.msra.mxu0 0
    %355 = vmatprep.subr.bf16.mxu0 0
    %356 = vmatpush2.bf16.msra.mxu0 0
    %357 = vmatprep.mubr.bf16.mxu0 0
    %358 = vmatmul.mubr.bf16.gmra.mxu0 %v323
    %v359 = vpop.f32.mrf.mxu0
    %v360 = vadd.f32 0.0, %v359
    %v361 = vpop.f32.mrf.mxu0
    %v362 = vadd.f32 0.0, %v361
    %v363 = vpop.f32.mrf.mxu0
    %v364 = vadd.f32 0.0, %v363
    %v365 = vpop.f32.mrf.mxu0
    %v366 = vadd.f32 0.0, %v365
    %367 = vdwg.mxu0
    %v368 = vsub.f32 0.0, %v360
    %v369 = vsub.f32 0.0, %v364
    %372 = vrot.lane.b32.xlu0 %v368, 112
    %v373 = vpop.permute.xlu0 %372
    %374 = vrot.lane.b32.xlu0 %v369, 112
    %v375 = vpop.permute.xlu0 %374
    %380 = vrot.lane.b32.xlu0 %v360, 16
    %v381 = vpop.permute.xlu0 %380
    %382 = vrot.lane.b32.xlu0 %v364, 16
    %v383 = vpop.permute.xlu0 %382
    %vm386 = vcmask 130048
    %v387 = vsel %vm386, %v373, %v381
    %v388 = vsel %vm386, %v375, %v383
    %vm389 = vcmask 261120
    %v390 = vsel %vm389, %v387, %v373
    %v391 = vsel %vm389, %v388, %v375
    %vm392 = vcmask 392192
    %v393 = vsel %vm392, %v390, %v381
    %v394 = vsel %vm392, %v391, %v383
    %v395 = vmul.f32 %v360, %v46
    %v396 = vmul.f32 %v364, %v47
    %v397 = vmul.f32 %v393, %v48
    %v398 = vmul.f32 %v394, %v49
    %v399 = vadd.f32 %v395, %v397
    %v400 = vadd.f32 %v396, %v398
    %401 = vrot.lane.b32.xlu0 %v368, 48
    %v402 = vpop.permute.xlu0 %401
    %403 = vrot.lane.b32.xlu0 %v369, 48
    %v404 = vpop.permute.xlu0 %403
    %407 = vrot.lane.b32.xlu0 %v360, 80
    %v408 = vpop.permute.xlu0 %407
    %409 = vrot.lane.b32.xlu0 %v364, 80
    %v410 = vpop.permute.xlu0 %409
    %v413 = vsel %vm386, %v402, %v408
    %v414 = vsel %vm386, %v404, %v410
    %v415 = vsel %vm389, %v413, %v402
    %v416 = vsel %vm389, %v414, %v404
    %v417 = vsel %vm392, %v415, %v408
    %v418 = vsel %vm392, %v416, %v410
    %421 = vrot.lane.b32.xlu0 %v46, 64
    %v422 = vpop.permute.xlu0 %421
    %423 = vrot.lane.b32.xlu0 %v47, 64
    %v424 = vpop.permute.xlu0 %423
    %v427 = vmul.f32 %v360, %v422
    %v428 = vmul.f32 %v364, %v424
    %v429 = vmul.f32 %v417, %v48
    %v430 = vmul.f32 %v418, %v49
    %433 = vrot.lane.b32.xlu0 %v429, 64
    %v434 = vpop.permute.xlu0 %433
    %435 = vrot.lane.b32.xlu0 %v430, 64
    %v436 = vpop.permute.xlu0 %435
    %v439 = vadd.f32 %v427, %v434
    %v440 = vadd.f32 %v428, %v436
    %v441 = vpack.c.bf16 %v400, %v399
    %v442 = vpack.c.bf16 %v440, %v439
    %444 = vrot.lane.b32.xlu0 %v442, 64
    %v445 = vpop.permute.xlu0 %444
    %v447 = vsel %vm389, %v441, 0
    %v450 = vsel %vm389, %v445, 0
    %452 = vmatprep.subr.bf16.mxu0 0
    %453 = vmatpush1.bf16.xpose.msra.mxu0 0
    %454 = vmatprep.subr.bf16.mxu0 0
    %455 = vmatpush1.bf16.xpose.msra.mxu0 0
    %456 = vmatprep.subr.bf16.mxu0 0
    %457 = vmatpush1.bf16.xpose.msra.mxu0 0
    %458 = vmatprep.subr.bf16.mxu0 0
    %459 = vmatpush1.bf16.xpose.msra.mxu0 0
    %460 = vmatprep.subr.bf16.mxu0 0
    %461 = vmatpush1.bf16.xpose.msra.mxu0 0
    %462 = vmatprep.subr.bf16.mxu0 0
    %463 = vmatpush1.bf16.xpose.msra.mxu0 0
    %464 = vmatprep.subr.bf16.mxu0 0
    %465 = vmatpush1.bf16.xpose.msra.mxu0 0
    %466 = vmatprep.subr.bf16.mxu0 0
    %467 = vmatpush1.bf16.xpose.msra.mxu0 %v450
    %468 = vmatprep.subr.bf16.mxu0 0
    %469 = vmatpush2.bf16.xpose.msra.mxu0 0
    %470 = vmatprep.subr.bf16.mxu0 0
    %471 = vmatpush2.bf16.xpose.msra.mxu0 0
    %472 = vmatprep.subr.bf16.mxu0 0
    %473 = vmatpush2.bf16.xpose.msra.mxu0 0
    %474 = vmatprep.subr.bf16.mxu0 0
    %475 = vmatpush2.bf16.xpose.msra.mxu0 0
    %476 = vmatprep.subr.bf16.mxu0 0
    %477 = vmatpush2.bf16.xpose.msra.mxu0 0
    %478 = vmatprep.subr.bf16.mxu0 0
    %479 = vmatpush2.bf16.xpose.msra.mxu0 0
    %480 = vmatprep.subr.bf16.mxu0 0
    %481 = vmatpush2.bf16.xpose.msra.mxu0 0
    %482 = vmatprep.subr.bf16.mxu0 0
    %483 = vmatpush2.bf16.xpose.msra.mxu0 0
    %484 = vmatprep.mubr.bf16.mxu0 0
    %485 = vmatmul.mubr.bf16.gmra.mxu0 %v447
    %v486 = vpop.f32.mrf.mxu0
    %v487 = vadd.f32 %v50, %v486
    %v488 = vpop.f32.mrf.mxu0
    %v489 = vpop.f32.mrf.mxu0
    %v490 = vadd.f32 %v51, %v489
    %v491 = vpop.f32.mrf.mxu0
    %492 = vdwg.mxu0
    %v493 = vsel %vm386, %v487, -inf
    %494 = vmax.xlane.f32.xlu0 %v493
    %v495 = vpop.xlane.xlu0 %494
    %v496 = vsel %vm386, %v490, -inf
    %497 = vmax.xlane.f32.xlu0 %v496
    %v498 = vpop.xlane.xlu0 %497
    %v499 = vsub.f32 %v487, %v495
    %v500 = vsub.f32 %v490, %v498
    %v501 = vmul.f32 %v499, 1.442695
    %v502 = vpow.pop %v501
    %v503 = vmul.f32 %v500, 1.442695
    %v504 = vpow.pop %v503
    %v505 = vsel %vm386, %v502, 0.0
    %506 = vadd.xlane.f32.xlu0 %v505
    %v507 = vpop.xlane.xlu0 %506
    %v508 = vsel %vm386, %v504, 0.0
    %509 = vadd.xlane.f32.xlu0 %v508
    %v510 = vpop.xlane.xlu0 %509
    %v511 = vrcp.pop %v507
    %v512 = vrcp.pop %v510
    %v513 = vmul.f32 %v502, %v511
    %v514 = vmul.f32 %v504, %v512
    %v515 = vpack.c.bf16 %v514, %v513
    %v516 = vpack.c.bf16 %v366, %v362
    %v518 = vsel %vm386, %v515, 0
    %520 = vmatprep.subr.bf16.mxu0 0
    %521 = vmatpush1.bf16.msra.mxu0 0
    %522 = vmatprep.subr.bf16.mxu0 0
    %523 = vmatpush1.bf16.msra.mxu0 0
    %524 = vmatprep.subr.bf16.mxu0 0
    %525 = vmatpush1.bf16.msra.mxu0 0
    %526 = vmatprep.subr.bf16.mxu0 0
    %527 = vmatpush1.bf16.msra.mxu0 0
    %528 = vmatprep.subr.bf16.mxu0 0
    %529 = vmatpush1.bf16.msra.mxu0 0
    %530 = vmatprep.subr.bf16.mxu0 0
    %531 = vmatpush1.bf16.msra.mxu0 0
    %532 = vmatprep.subr.bf16.mxu0 0
    %533 = vmatpush1.bf16.msra.mxu0 0
    %534 = vmatprep.subr.bf16.mxu0 0
    %535 = vmatpush1.bf16.msra.mxu0 %v516
    %536 = vmatprep.subr.bf16.mxu0 0
    %537 = vmatpush2.bf16.msra.mxu0 0
    %538 = vmatprep.subr.bf16.mxu0 0
    %539 = vmatpush2.bf16.msra.mxu0 0
    %540 = vmatprep.subr.bf16.mxu0 0
    %541 = vmatpush2.bf16.msra.mxu0 0
    %542 = vmatprep.subr.bf16.mxu0 0
    %543 = vmatpush2.bf16.msra.mxu0 0
    %544 = vmatprep.subr.bf16.mxu0 0
    %545 = vmatpush2.bf16.msra.mxu0 0
    %546 = vmatprep.subr.bf16.mxu0 0
    %547 = vmatpush2.bf16.msra.mxu0 0
    %548 = vmatprep.subr.bf16.mxu0 0
    %549 = vmatpush2.bf16.msra.mxu0 0
    %550 = vmatprep.subr.bf16.mxu0 0
    %551 = vmatpush2.bf16.msra.mxu0 0
    %552 = vmatprep.mubr.bf16.mxu0 0
    %553 = vmatmul.mubr.bf16.gmra.mxu0 %v518
    %v554 = vpop.f32.mrf.mxu0
    %v555 = vadd.f32 0.0, %v554
    %v556 = vpop.f32.mrf.mxu0
    %v557 = vpop.f32.mrf.mxu0
    %v558 = vadd.f32 0.0, %v557
    %v559 = vpop.f32.mrf.mxu0
    %560 = vdwg.mxu0
    %562 = vrot.lane.b32.xlu0 %v441, 96
    %v563 = vpop.permute.xlu0 %562
    %564 = vrot.lane.b32.xlu0 %v442, 32
    %v565 = vpop.permute.xlu0 %564
    %v567 = vsel %vm389, %v563, 0
    %v570 = vsel %vm389, %v565, 0
    %572 = vmatprep.subr.bf16.mxu0 0
    %573 = vmatpush1.bf16.xpose.msra.mxu0 0
    %574 = vmatprep.subr.bf16.mxu0 0
    %575 = vmatpush1.bf16.xpose.msra.mxu0 0
    %576 = vmatprep.subr.bf16.mxu0 0
    %577 = vmatpush1.bf16.xpose.msra.mxu0 0
    %578 = vmatprep.subr.bf16.mxu0 0
    %579 = vmatpush1.bf16.xpose.msra.mxu0 0
    %580 = vmatprep.subr.bf16.mxu0 0
    %581 = vmatpush1.bf16.xpose.msra.mxu0 0
    %582 = vmatprep.subr.bf16.mxu0 0
    %583 = vmatpush1.bf16.xpose.msra.mxu0 0
    %584 = vmatprep.subr.bf16.mxu0 0
    %585 = vmatpush1.bf16.xpose.msra.mxu0 0
    %586 = vmatprep.subr.bf16.mxu0 0
    %587 = vmatpush1.bf16.xpose.msra.mxu0 %v570
    %588 = vmatprep.subr.bf16.mxu0 0
    %589 = vmatpush2.bf16.xpose.msra.mxu0 0
    %590 = vmatprep.subr.bf16.mxu0 0
    %591 = vmatpush2.bf16.xpose.msra.mxu0 0
    %592 = vmatprep.subr.bf16.mxu0 0
    %593 = vmatpush2.bf16.xpose.msra.mxu0 0
    %594 = vmatprep.subr.bf16.mxu0 0
    %595 = vmatpush2.bf16.xpose.msra.mxu0 0
    %596 = vmatprep.subr.bf16.mxu0 0
    %597 = vmatpush2.bf16.xpose.msra.mxu0 0
    %598 = vmatprep.subr.bf16.mxu0 0
    %599 = vmatpush2.bf16.xpose.msra.mxu0 0
    %600 = vmatprep.subr.bf16.mxu0 0
    %601 = vmatpush2.bf16.xpose.msra.mxu0 0
    %602 = vmatprep.subr.bf16.mxu0 0
    %603 = vmatpush2.bf16.xpose.msra.mxu0 0
    %604 = vmatprep.mubr.bf16.mxu0 0
    %605 = vmatmul.mubr.bf16.gmra.mxu0 %v567
    %v606 = vpop.f32.mrf.mxu0
    %v607 = vadd.f32 %v50, %v606
    %v608 = vpop.f32.mrf.mxu0
    %v609 = vpop.f32.mrf.mxu0
    %v610 = vadd.f32 %v51, %v609
    %v611 = vpop.f32.mrf.mxu0
    %612 = vdwg.mxu0
    %v613 = vsel %vm386, %v607, -inf
    %614 = vmax.xlane.f32.xlu0 %v613
    %v615 = vpop.xlane.xlu0 %614
    %v616 = vsel %vm386, %v610, -inf
    %617 = vmax.xlane.f32.xlu0 %v616
    %v618 = vpop.xlane.xlu0 %617
    %v619 = vsub.f32 %v607, %v615
    %v620 = vsub.f32 %v610, %v618
    %v621 = vmul.f32 %v619, 1.442695
    %v622 = vpow.pop %v621
    %v623 = vmul.f32 %v620, 1.442695
    %v624 = vpow.pop %v623
    %v625 = vsel %vm386, %v622, 0.0
    %626 = vadd.xlane.f32.xlu0 %v625
    %v627 = vpop.xlane.xlu0 %626
    %v628 = vsel %vm386, %v624, 0.0
    %629 = vadd.xlane.f32.xlu0 %v628
    %v630 = vpop.xlane.xlu0 %629
    %v631 = vrcp.pop %v627
    %v632 = vrcp.pop %v630
    %v633 = vmul.f32 %v622, %v631
    %v634 = vmul.f32 %v624, %v632
    %v635 = vpack.c.bf16 %v634, %v633
    %637 = vrot.lane.b32.xlu0 %v516, 96
    %v638 = vpop.permute.xlu0 %637
    %v641 = vsel %vm386, %v635, 0
    %643 = vmatprep.subr.bf16.mxu0 0
    %644 = vmatpush1.bf16.msra.mxu0 0
    %645 = vmatprep.subr.bf16.mxu0 0
    %646 = vmatpush1.bf16.msra.mxu0 0
    %647 = vmatprep.subr.bf16.mxu0 0
    %648 = vmatpush1.bf16.msra.mxu0 0
    %649 = vmatprep.subr.bf16.mxu0 0
    %650 = vmatpush1.bf16.msra.mxu0 0
    %651 = vmatprep.subr.bf16.mxu0 0
    %652 = vmatpush1.bf16.msra.mxu0 0
    %653 = vmatprep.subr.bf16.mxu0 0
    %654 = vmatpush1.bf16.msra.mxu0 0
    %655 = vmatprep.subr.bf16.mxu0 0
    %656 = vmatpush1.bf16.msra.mxu0 0
    %657 = vmatprep.subr.bf16.mxu0 0
    %658 = vmatpush1.bf16.msra.mxu0 %v638
    %659 = vmatprep.subr.bf16.mxu0 0
    %660 = vmatpush2.bf16.msra.mxu0 0
    %661 = vmatprep.subr.bf16.mxu0 0
    %662 = vmatpush2.bf16.msra.mxu0 0
    %663 = vmatprep.subr.bf16.mxu0 0
    %664 = vmatpush2.bf16.msra.mxu0 0
    %665 = vmatprep.subr.bf16.mxu0 0
    %666 = vmatpush2.bf16.msra.mxu0 0
    %667 = vmatprep.subr.bf16.mxu0 0
    %668 = vmatpush2.bf16.msra.mxu0 0
    %669 = vmatprep.subr.bf16.mxu0 0
    %670 = vmatpush2.bf16.msra.mxu0 0
    %671 = vmatprep.subr.bf16.mxu0 0
    %672 = vmatpush2.bf16.msra.mxu0 0
    %673 = vmatprep.subr.bf16.mxu0 0
    %674 = vmatpush2.bf16.msra.mxu0 0
    %675 = vmatprep.mubr.bf16.mxu0 0
    %676 = vmatmul.mubr.bf16.gmra.mxu0 %v641
    %v677 = vpop.f32.mrf.mxu0
    %v678 = vadd.f32 0.0, %v677
    %v679 = vpop.f32.mrf.mxu0
    %v680 = vpop.f32.mrf.mxu0
    %v681 = vadd.f32 0.0, %v680
    %v682 = vpop.f32.mrf.mxu0
    %683 = vdwg.mxu0
    %686 = vrot.lane.b32.xlu0 %v678, 32
    %v687 = vpop.permute.xlu0 %686
    %688 = vrot.lane.b32.xlu0 %v681, 32
    %v689 = vpop.permute.xlu0 %688
    %v692 = vsel %vm389, %v555, %v687
    %v693 = vsel %vm389, %v558, %v689
    %v694 = vld [vmem:[%s8] sm:$0xf]
    %v695 = vld [vmem:[%s8 + $0x4] sm:$0xf]
    %v696 = vld [vmem:[%s8 + $0x8] sm:$0xf]
    %v697 = vld [vmem:[%s8 + $0xc] sm:$0xf]
    %v698 = vld [vmem:[%s8 + $0x10] sm:$0xf]
    %v699 = vld [vmem:[%s8 + $0x14] sm:$0xf]
    %v700 = vld [vmem:[%s8 + $0x18] sm:$0xf]
    %v701 = vld [vmem:[%s8 + $0x1c] sm:$0xf]
    %v702 = vpack.c.bf16 %v693, %v692
    %v711 = vunpack.c.l.b16 %v694
    %v712 = vunpack.c.l.b16 %v695
    %v713 = vunpack.c.l.b16 %v696
    %v714 = vunpack.c.l.b16 %v697
    %v715 = vunpack.c.l.b16 %v698
    %v716 = vunpack.c.l.b16 %v699
    %v717 = vunpack.c.l.b16 %v700
    %v718 = vunpack.c.l.b16 %v701
    %v719 = vpack.c.b16 %v712, %v711
    %v720 = vpack.c.b16 %v714, %v713
    %v721 = vpack.c.b16 %v716, %v715
    %v722 = vpack.c.b16 %v718, %v717
    %v728 = vsel %vm249, %v702, 0
    %730 = vmatprep.subr.bf16.mxu0 0
    %731 = vmatpush1.bf16.msra.mxu0 0
    %732 = vmatprep.subr.bf16.mxu0 0
    %733 = vmatpush1.bf16.msra.mxu0 0
    %734 = vmatprep.subr.bf16.mxu0 0
    %735 = vmatpush1.bf16.msra.mxu0 0
    %736 = vmatprep.subr.bf16.mxu0 0
    %737 = vmatpush1.bf16.msra.mxu0 0
    %738 = vmatprep.subr.bf16.mxu0 0
    %739 = vmatpush1.bf16.msra.mxu0 %v722
    %740 = vmatprep.subr.bf16.mxu0 0
    %741 = vmatpush1.bf16.msra.mxu0 %v721
    %742 = vmatprep.subr.bf16.mxu0 0
    %743 = vmatpush1.bf16.msra.mxu0 %v720
    %744 = vmatprep.subr.bf16.mxu0 0
    %745 = vmatpush1.bf16.msra.mxu0 %v719
    %746 = vmatprep.subr.bf16.mxu0 0
    %747 = vmatpush2.bf16.msra.mxu0 0
    %748 = vmatprep.subr.bf16.mxu0 0
    %749 = vmatpush2.bf16.msra.mxu0 0
    %750 = vmatprep.subr.bf16.mxu0 0
    %751 = vmatpush2.bf16.msra.mxu0 0
    %752 = vmatprep.subr.bf16.mxu0 0
    %753 = vmatpush2.bf16.msra.mxu0 0
    %754 = vmatprep.subr.bf16.mxu0 0
    %755 = vmatpush2.bf16.msra.mxu0 0
    %756 = vmatprep.subr.bf16.mxu0 0
    %757 = vmatpush2.bf16.msra.mxu0 0
    %758 = vmatprep.subr.bf16.mxu0 0
    %759 = vmatpush2.bf16.msra.mxu0 0
    %760 = vmatprep.subr.bf16.mxu0 0
    %761 = vmatpush2.bf16.msra.mxu0 0
    %762 = vmatprep.mubr.bf16.mxu0 0
    %763 = vmatmul.mubr.bf16.gmra.mxu0 %v728
    %v764 = vpop.f32.mrf.mxu0
    %v765 = vadd.f32 0.0, %v764
    %v766 = vpop.f32.mrf.mxu0
    %v767 = vpop.f32.mrf.mxu0
    %v768 = vadd.f32 0.0, %v767
    %v769 = vpop.f32.mrf.mxu0
    %770 = vdwg.mxu0
    %v771 = vadd.f32 %v240, %v765
    %v772 = vadd.f32 %v243, %v768
    %v773 = vld [vmem:[%s9] sm:$0x1]
    %v774 = vmul.f32 %v771, %v771
    %v775 = vmul.f32 %v772, %v772
    %v776 = vsel %vm249, %v774, 0.0
    %777 = vadd.xlane.f32.xlu0 %v776
    %v778 = vpop.xlane.xlu0 %777
    %v779 = vsel %vm249, %v775, 0.0
    %780 = vadd.xlane.f32.xlu0 %v779
    %v781 = vpop.xlane.xlu0 %780
    %v782 = vmul.f32 %v778, %v256
    %v783 = vmul.f32 %v781, %v256
    %v784 = vadd.f32 %v782, 1e-05
    %v785 = vadd.f32 %v783, 1e-05
    %v786 = vrsqrt.pop %v784
    %v787 = vrsqrt.pop %v785
    %v788 = vmul.f32 %v771, %v786
    %v789 = vmul.f32 %v772, %v787
    %v791 = vlaneseq
    %v792 = vshrl.u32 %v791, 7
    %v793 = vsub.s32 0, %v792
    %v794 = vrot.slane %v773, %v793
    %v796 = vmul.f32 %v788, %v794
    %v797 = vmul.f32 %v789, %v794
    %v798 = vld [vmem:[%s10] sm:$0xff]
    %v799 = vld [vmem:[%s10 + $0x8] sm:$0xff]
    %v800 = vld [vmem:[%s10 + $0x10] sm:$0xff]
    %v801 = vld [vmem:[%s10 + $0x18] sm:$0xff]
    %v802 = vld [vmem:[%s10 + $0x20] sm:$0xff]
    %v803 = vld [vmem:[%s10 + $0x28] sm:$0xff]
    %v804 = vld [vmem:[%s10 + $0x30] sm:$0xff]
    %v805 = vld [vmem:[%s10 + $0x38] sm:$0xff]
    %v806 = vpack.c.bf16 %v797, %v796
    %v815 = vunpack.c.l.b16 %v798
    %v816 = vunpack.c.h.b16 %v798
    %v817 = vunpack.c.l.b16 %v799
    %v818 = vunpack.c.h.b16 %v799
    %v819 = vunpack.c.l.b16 %v800
    %v820 = vunpack.c.h.b16 %v800
    %v821 = vunpack.c.l.b16 %v801
    %v822 = vunpack.c.h.b16 %v801
    %v823 = vunpack.c.l.b16 %v802
    %v824 = vunpack.c.h.b16 %v802
    %v825 = vunpack.c.l.b16 %v803
    %v826 = vunpack.c.h.b16 %v803
    %v827 = vunpack.c.l.b16 %v804
    %v828 = vunpack.c.h.b16 %v804
    %v829 = vunpack.c.l.b16 %v805
    %v830 = vunpack.c.h.b16 %v805
    %v831 = vpack.c.b16 %v817, %v815
    %v832 = vpack.c.b16 %v818, %v816
    %v833 = vpack.c.b16 %v821, %v819
    %v834 = vpack.c.b16 %v822, %v820
    %v835 = vpack.c.b16 %v825, %v823
    %v836 = vpack.c.b16 %v826, %v824
    %v837 = vpack.c.b16 %v829, %v827
    %v838 = vpack.c.b16 %v830, %v828
    %v848 = vsel %vm249, %v806, 0
    %850 = vmatprep.subr.bf16.mxu0 0
    %851 = vmatpush1.bf16.msra.mxu0 0
    %852 = vmatprep.subr.bf16.mxu0 0
    %853 = vmatpush1.bf16.msra.mxu0 0
    %854 = vmatprep.subr.bf16.mxu0 0
    %855 = vmatpush1.bf16.msra.mxu0 0
    %856 = vmatprep.subr.bf16.mxu0 0
    %857 = vmatpush1.bf16.msra.mxu0 0
    %858 = vmatprep.subr.bf16.mxu0 %v838
    %859 = vmatpush1.bf16.msra.mxu0 %v837
    %860 = vmatprep.subr.bf16.mxu0 %v836
    %861 = vmatpush1.bf16.msra.mxu0 %v835
    %862 = vmatprep.subr.bf16.mxu0 %v834
    %863 = vmatpush1.bf16.msra.mxu0 %v833
    %864 = vmatprep.subr.bf16.mxu0 %v832
    %865 = vmatpush1.bf16.msra.mxu0 %v831
    %866 = vmatprep.subr.bf16.mxu0 0
    %867 = vmatpush2.bf16.msra.mxu0 0
    %868 = vmatprep.subr.bf16.mxu0 0
    %869 = vmatpush2.bf16.msra.mxu0 0
    %870 = vmatprep.subr.bf16.mxu0 0
    %871 = vmatpush2.bf16.msra.mxu0 0
    %872 = vmatprep.subr.bf16.mxu0 0
    %873 = vmatpush2.bf16.msra.mxu0 0
    %874 = vmatprep.subr.bf16.mxu0 0
    %875 = vmatpush2.bf16.msra.mxu0 0
    %876 = vmatprep.subr.bf16.mxu0 0
    %877 = vmatpush2.bf16.msra.mxu0 0
    %878 = vmatprep.subr.bf16.mxu0 0
    %879 = vmatpush2.bf16.msra.mxu0 0
    %880 = vmatprep.subr.bf16.mxu0 0
    %881 = vmatpush2.bf16.msra.mxu0 0
    %882 = vmatprep.mubr.bf16.mxu0 0
    %883 = vmatmul.mubr.bf16.gmra.mxu0 %v848
    %v884 = vpop.f32.mrf.mxu0
    %v885 = vadd.f32 0.0, %v884
    %v886 = vpop.f32.mrf.mxu0
    %v887 = vadd.f32 0.0, %v886
    %v888 = vpop.f32.mrf.mxu0
    %v889 = vadd.f32 0.0, %v888
    %v890 = vpop.f32.mrf.mxu0
    %v891 = vadd.f32 0.0, %v890
    %892 = vdwg.mxu0
    %v893 = vsub.f32 0.0, %v885
    %v894 = vsub.f32 0.0, %v889
    %v895 = vmul.f32 %v893, 1.442695
    %v896 = vpow.pop %v895
    %v897 = vmul.f32 %v894, 1.442695
    %v898 = vpow.pop %v897
    %v899 = vadd.f32 %v896, 1.0
    %v900 = vadd.f32 %v898, 1.0
    %v901 = vrcp.pop %v899
    %v902 = vrcp.pop %v900
    %v903 = vmul.f32 %v885, %v901
    %v904 = vmul.f32 %v889, %v902
    %v905 = vmul.f32 %v903, %v887
    %v906 = vmul.f32 %v904, %v891
    %v907 = vld [vmem:[%s11] sm:$0xf]
    %v908 = vld [vmem:[%s11 + $0x4] sm:$0xf]
    %v909 = vld [vmem:[%s11 + $0x8] sm:$0xf]
    %v910 = vld [vmem:[%s11 + $0xc] sm:$0xf]
    %v911 = vld [vmem:[%s11 + $0x10] sm:$0xf]
    %v912 = vld [vmem:[%s11 + $0x14] sm:$0xf]
    %v913 = vld [vmem:[%s11 + $0x18] sm:$0xf]
    %v914 = vld [vmem:[%s11 + $0x1c] sm:$0xf]
    %v915 = vld [vmem:[%s11 + $0x20] sm:$0xf]
    %v916 = vld [vmem:[%s11 + $0x24] sm:$0xf]
    %v917 = vld [vmem:[%s11 + $0x28] sm:$0xf]
    %v918 = vld [vmem:[%s11 + $0x2c] sm:$0xf]
    %v919 = vld [vmem:[%s11 + $0x30] sm:$0xf]
    %v920 = vld [vmem:[%s11 + $0x34] sm:$0xf]
    %v921 = vld [vmem:[%s11 + $0x38] sm:$0xf]
    %v922 = vld [vmem:[%s11 + $0x3c] sm:$0xf]
    %v923 = vpack.c.bf16 %v906, %v905
    %v940 = vunpack.c.l.b16 %v907
    %v941 = vunpack.c.l.b16 %v908
    %v942 = vunpack.c.l.b16 %v909
    %v943 = vunpack.c.l.b16 %v910
    %v944 = vunpack.c.l.b16 %v911
    %v945 = vunpack.c.l.b16 %v912
    %v946 = vunpack.c.l.b16 %v913
    %v947 = vunpack.c.l.b16 %v914
    %v948 = vunpack.c.l.b16 %v915
    %v949 = vunpack.c.l.b16 %v916
    %v950 = vunpack.c.l.b16 %v917
    %v951 = vunpack.c.l.b16 %v918
    %v952 = vunpack.c.l.b16 %v919
    %v953 = vunpack.c.l.b16 %v920
    %v954 = vunpack.c.l.b16 %v921
    %v955 = vunpack.c.l.b16 %v922
    %v956 = vpack.c.b16 %v941, %v940
    %v957 = vpack.c.b16 %v943, %v942
    %v958 = vpack.c.b16 %v945, %v944
    %v959 = vpack.c.b16 %v947, %v946
    %v960 = vpack.c.b16 %v949, %v948
    %v961 = vpack.c.b16 %v951, %v950
    %v962 = vpack.c.b16 %v953, %v952
    %v963 = vpack.c.b16 %v955, %v954
    %972 = vmatprep.subr.bf16.mxu0 0
    %973 = vmatpush1.bf16.msra.mxu0 %v963
    %974 = vmatprep.subr.bf16.mxu0 0
    %975 = vmatpush1.bf16.msra.mxu0 %v962
    %976 = vmatprep.subr.bf16.mxu0 0
    %977 = vmatpush1.bf16.msra.mxu0 %v961
    %978 = vmatprep.subr.bf16.mxu0 0
    %979 = vmatpush1.bf16.msra.mxu0 %v960
    %980 = vmatprep.subr.bf16.mxu0 0
    %981 = vmatpush1.bf16.msra.mxu0 %v959
    %982 = vmatprep.subr.bf16.mxu0 0
    %983 = vmatpush1.bf16.msra.mxu0 %v958
    %984 = vmatprep.subr.bf16.mxu0 0
    %985 = vmatpush1.bf16.msra.mxu0 %v957
    %986 = vmatprep.subr.bf16.mxu0 0
    %987 = vmatpush1.bf16.msra.mxu0 %v956
    %988 = vmatprep.subr.bf16.mxu0 0
    %989 = vmatpush2.bf16.msra.mxu0 0
    %990 = vmatprep.subr.bf16.mxu0 0
    %991 = vmatpush2.bf16.msra.mxu0 0
    %992 = vmatprep.subr.bf16.mxu0 0
    %993 = vmatpush2.bf16.msra.mxu0 0
    %994 = vmatprep.subr.bf16.mxu0 0
    %995 = vmatpush2.bf16.msra.mxu0 0
    %996 = vmatprep.subr.bf16.mxu0 0
    %997 = vmatpush2.bf16.msra.mxu0 0
    %998 = vmatprep.subr.bf16.mxu0 0
    %999 = vmatpush2.bf16.msra.mxu0 0
    %1000 = vmatprep.subr.bf16.mxu0 0
    %1001 = vmatpush2.bf16.msra.mxu0 0
    %1002 = vmatprep.subr.bf16.mxu0 0
    %1003 = vmatpush2.bf16.msra.mxu0 0
    %1004 = vmatprep.mubr.bf16.mxu0 0
    %1005 = vmatmul.mubr.bf16.gmra.mxu0 %v923
    %v1006 = vpop.f32.mrf.mxu0
    %v1007 = vadd.f32 0.0, %v1006
    %v1008 = vpop.f32.mrf.mxu0
    %v1009 = vpop.f32.mrf.mxu0
    %v1010 = vadd.f32 0.0, %v1009
    %v1011 = vpop.f32.mrf.mxu0
    %1012 = vdwg.mxu0
    %v1013 = vadd.f32 %v771, %v1007
    %v1014 = vadd.f32 %v772, %v1010
    %s1015 = scalar_lea.vmem %s6, 1
    %v1016 = vld [vmem:[%s1015] sm:$0x1]
    %v1017 = vmul.f32 %v1013, %v1013
    %v1018 = vmul.f32 %v1014, %v1014
    %v1019 = vsel %vm249, %v1017, 0.0
    %1020 = vadd.xlane.f32.xlu0 %v1019
    %v1021 = vpop.xlane.xlu0 %1020
    %v1022 = vsel %vm249, %v1018, 0.0
    %1023 = vadd.xlane.f32.xlu0 %v1022
    %v1024 = vpop.xlane.xlu0 %1023
    %v1025 = vmul.f32 %v1021, %v256
    %v1026 = vmul.f32 %v1024, %v256
    %v1027 = vadd.f32 %v1025, 1e-05
    %v1028 = vadd.f32 %v1026, 1e-05
    %v1029 = vrsqrt.pop %v1027
    %v1030 = vrsqrt.pop %v1028
    %v1031 = vmul.f32 %v1013, %v1029
    %v1032 = vmul.f32 %v1014, %v1030
    %v1034 = vlaneseq
    %v1035 = vshrl.u32 %v1034, 7
    %v1036 = vsub.s32 0, %v1035
    %v1037 = vrot.slane %v1016, %v1036
    %v1039 = vmul.f32 %v1031, %v1037
    %v1040 = vmul.f32 %v1032, %v1037
    %s1041 = scalar_lea.vmem %s7, 64
    %v1042 = vld [vmem:[%s1041] sm:$0xff]
    %v1043 = vld [vmem:[%s1041 + $0x8] sm:$0xff]
    %v1044 = vld [vmem:[%s1041 + $0x10] sm:$0xff]
    %v1045 = vld [vmem:[%s1041 + $0x18] sm:$0xff]
    %v1046 = vld [vmem:[%s1041 + $0x20] sm:$0xff]
    %v1047 = vld [vmem:[%s1041 + $0x28] sm:$0xff]
    %v1048 = vld [vmem:[%s1041 + $0x30] sm:$0xff]
    %v1049 = vld [vmem:[%s1041 + $0x38] sm:$0xff]
    %v1050 = vpack.c.bf16 %v1040, %v1039
    %v1059 = vunpack.c.l.b16 %v1042
    %v1060 = vunpack.c.h.b16 %v1042
    %v1061 = vunpack.c.l.b16 %v1043
    %v1062 = vunpack.c.h.b16 %v1043
    %v1063 = vunpack.c.l.b16 %v1044
    %v1064 = vunpack.c.h.b16 %v1044
    %v1065 = vunpack.c.l.b16 %v1045
    %v1066 = vunpack.c.h.b16 %v1045
    %v1067 = vunpack.c.l.b16 %v1046
    %v1068 = vunpack.c.h.b16 %v1046
    %v1069 = vunpack.c.l.b16 %v1047
    %v1070 = vunpack.c.h.b16 %v1047
    %v1071 = vunpack.c.l.b16 %v1048
    %v1072 = vunpack.c.h.b16 %v1048
    %v1073 = vunpack.c.l.b16 %v1049
    %v1074 = vunpack.c.h.b16 %v1049
    %v1075 = vpack.c.b16 %v1061, %v1059
    %v1076 = vpack.c.b16 %v1062, %v1060
    %v1077 = vpack.c.b16 %v1065, %v1063
    %v1078 = vpack.c.b16 %v1066, %v1064
    %v1079 = vpack.c.b16 %v1069, %v1067
    %v1080 = vpack.c.b16 %v1070, %v1068
    %v1081 = vpack.c.b16 %v1073, %v1071
    %v1082 = vpack.c.b16 %v1074, %v1072
    %v1092 = vsel %vm249, %v1050, 0
    %1094 = vmatprep.subr.bf16.mxu0 0
    %1095 = vmatpush1.bf16.msra.mxu0 0
    %1096 = vmatprep.subr.bf16.mxu0 0
    %1097 = vmatpush1.bf16.msra.mxu0 0
    %1098 = vmatprep.subr.bf16.mxu0 0
    %1099 = vmatpush1.bf16.msra.mxu0 0
    %1100 = vmatprep.subr.bf16.mxu0 0
    %1101 = vmatpush1.bf16.msra.mxu0 0
    %1102 = vmatprep.subr.bf16.mxu0 %v1082
    %1103 = vmatpush1.bf16.msra.mxu0 %v1081
    %1104 = vmatprep.subr.bf16.mxu0 %v1080
    %1105 = vmatpush1.bf16.msra.mxu0 %v1079
    %1106 = vmatprep.subr.bf16.mxu0 %v1078
    %1107 = vmatpush1.bf16.msra.mxu0 %v1077
    %1108 = vmatprep.subr.bf16.mxu0 %v1076
    %1109 = vmatpush1.bf16.msra.mxu0 %v1075
    %1110 = vmatprep.subr.bf16.mxu0 0
    %1111 = vmatpush2.bf16.msra.mxu0 0
    %1112 = vmatprep.subr.bf16.mxu0 0
    %1113 = vmatpush2.bf16.msra.mxu0 0
    %1114 = vmatprep.subr.bf16.mxu0 0
    %1115 = vmatpush2.bf16.msra.mxu0 0
    %1116 = vmatprep.subr.bf16.mxu0 0
    %1117 = vmatpush2.bf16.msra.mxu0 0
    %1118 = vmatprep.subr.bf16.mxu0 0
    %1119 = vmatpush2.bf16.msra.mxu0 0
    %1120 = vmatprep.subr.bf16.mxu0 0
    %1121 = vmatpush2.bf16.msra.mxu0 0
    %1122 = vmatprep.subr.bf16.mxu0 0
    %1123 = vmatpush2.bf16.msra.mxu0 0
    %1124 = vmatprep.subr.bf16.mxu0 0
    %1125 = vmatpush2.bf16.msra.mxu0 0
    %1126 = vmatprep.mubr.bf16.mxu0 0
    %1127 = vmatmul.mubr.bf16.gmra.mxu0 %v1092
    %v1128 = vpop.f32.mrf.mxu0
    %v1129 = vadd.f32 0.0, %v1128
    %v1130 = vpop.f32.mrf.mxu0
    %v1131 = vadd.f32 0.0, %v1130
    %v1132 = vpop.f32.mrf.mxu0
    %v1133 = vadd.f32 0.0, %v1132
    %v1134 = vpop.f32.mrf.mxu0
    %v1135 = vadd.f32 0.0, %v1134
    %1136 = vdwg.mxu0
    %v1137 = vsub.f32 0.0, %v1129
    %v1138 = vsub.f32 0.0, %v1133
    %1141 = vrot.lane.b32.xlu0 %v1137, 112
    %v1142 = vpop.permute.xlu0 %1141
    %1143 = vrot.lane.b32.xlu0 %v1138, 112
    %v1144 = vpop.permute.xlu0 %1143
    %1149 = vrot.lane.b32.xlu0 %v1129, 16
    %v1150 = vpop.permute.xlu0 %1149
    %1151 = vrot.lane.b32.xlu0 %v1133, 16
    %v1152 = vpop.permute.xlu0 %1151
    %v1155 = vsel %vm386, %v1142, %v1150
    %v1156 = vsel %vm386, %v1144, %v1152
    %v1157 = vsel %vm389, %v1155, %v1142
    %v1158 = vsel %vm389, %v1156, %v1144
    %v1159 = vsel %vm392, %v1157, %v1150
    %v1160 = vsel %vm392, %v1158, %v1152
    %v1161 = vmul.f32 %v1129, %v46
    %v1162 = vmul.f32 %v1133, %v47
    %v1163 = vmul.f32 %v1159, %v48
    %v1164 = vmul.f32 %v1160, %v49
    %v1165 = vadd.f32 %v1161, %v1163
    %v1166 = vadd.f32 %v1162, %v1164
    %1167 = vrot.lane.b32.xlu0 %v1137, 48
    %v1168 = vpop.permute.xlu0 %1167
    %1169 = vrot.lane.b32.xlu0 %v1138, 48
    %v1170 = vpop.permute.xlu0 %1169
    %1173 = vrot.lane.b32.xlu0 %v1129, 80
    %v1174 = vpop.permute.xlu0 %1173
    %1175 = vrot.lane.b32.xlu0 %v1133, 80
    %v1176 = vpop.permute.xlu0 %1175
    %v1179 = vsel %vm386, %v1168, %v1174
    %v1180 = vsel %vm386, %v1170, %v1176
    %v1181 = vsel %vm389, %v1179, %v1168
    %v1182 = vsel %vm389, %v1180, %v1170
    %v1183 = vsel %vm392, %v1181, %v1174
    %v1184 = vsel %vm392, %v1182, %v1176
    %v1185 = vmul.f32 %v1129, %v422
    %v1186 = vmul.f32 %v1133, %v424
    %v1187 = vmul.f32 %v1183, %v48
    %v1188 = vmul.f32 %v1184, %v49
    %1191 = vrot.lane.b32.xlu0 %v1187, 64
    %v1192 = vpop.permute.xlu0 %1191
    %1193 = vrot.lane.b32.xlu0 %v1188, 64
    %v1194 = vpop.permute.xlu0 %1193
    %v1197 = vadd.f32 %v1185, %v1192
    %v1198 = vadd.f32 %v1186, %v1194
    %v1199 = vpack.c.bf16 %v1166, %v1165
    %v1200 = vpack.c.bf16 %v1198, %v1197
    %1202 = vrot.lane.b32.xlu0 %v1200, 64
    %v1203 = vpop.permute.xlu0 %1202
    %v1205 = vsel %vm389, %v1199, 0
    %v1208 = vsel %vm389, %v1203, 0
    %1210 = vmatprep.subr.bf16.mxu0 0
    %1211 = vmatpush1.bf16.xpose.msra.mxu0 0
    %1212 = vmatprep.subr.bf16.mxu0 0
    %1213 = vmatpush1.bf16.xpose.msra.mxu0 0
    %1214 = vmatprep.subr.bf16.mxu0 0
    %1215 = vmatpush1.bf16.xpose.msra.mxu0 0
    %1216 = vmatprep.subr.bf16.mxu0 0
    %1217 = vmatpush1.bf16.xpose.msra.mxu0 0
    %1218 = vmatprep.subr.bf16.mxu0 0
    %1219 = vmatpush1.bf16.xpose.msra.mxu0 0
    %1220 = vmatprep.subr.bf16.mxu0 0
    %1221 = vmatpush1.bf16.xpose.msra.mxu0 0
    %1222 = vmatprep.subr.bf16.mxu0 0
    %1223 = vmatpush1.bf16.xpose.msra.mxu0 0
    %1224 = vmatprep.subr.bf16.mxu0 0
    %1225 = vmatpush1.bf16.xpose.msra.mxu0 %v1208
    %1226 = vmatprep.subr.bf16.mxu0 0
    %1227 = vmatpush2.bf16.xpose.msra.mxu0 0
    %1228 = vmatprep.subr.bf16.mxu0 0
    %1229 = vmatpush2.bf16.xpose.msra.mxu0 0
    %1230 = vmatprep.subr.bf16.mxu0 0
    %1231 = vmatpush2.bf16.xpose.msra.mxu0 0
    %1232 = vmatprep.subr.bf16.mxu0 0
    %1233 = vmatpush2.bf16.xpose.msra.mxu0 0
    %1234 = vmatprep.subr.bf16.mxu0 0
    %1235 = vmatpush2.bf16.xpose.msra.mxu0 0
    %1236 = vmatprep.subr.bf16.mxu0 0
    %1237 = vmatpush2.bf16.xpose.msra.mxu0 0
    %1238 = vmatprep.subr.bf16.mxu0 0
    %1239 = vmatpush2.bf16.xpose.msra.mxu0 0
    %1240 = vmatprep.subr.bf16.mxu0 0
    %1241 = vmatpush2.bf16.xpose.msra.mxu0 0
    %1242 = vmatprep.mubr.bf16.mxu0 0
    %1243 = vmatmul.mubr.bf16.gmra.mxu0 %v1205
    %v1244 = vpop.f32.mrf.mxu0
    %v1245 = vadd.f32 %v50, %v1244
    %v1246 = vpop.f32.mrf.mxu0
    %v1247 = vpop.f32.mrf.mxu0
    %v1248 = vadd.f32 %v51, %v1247
    %v1249 = vpop.f32.mrf.mxu0
    %1250 = vdwg.mxu0
    %v1251 = vsel %vm386, %v1245, -inf
    %1252 = vmax.xlane.f32.xlu0 %v1251
    %v1253 = vpop.xlane.xlu0 %1252
    %v1254 = vsel %vm386, %v1248, -inf
    %1255 = vmax.xlane.f32.xlu0 %v1254
    %v1256 = vpop.xlane.xlu0 %1255
    %v1257 = vsub.f32 %v1245, %v1253
    %v1258 = vsub.f32 %v1248, %v1256
    %v1259 = vmul.f32 %v1257, 1.442695
    %v1260 = vpow.pop %v1259
    %v1261 = vmul.f32 %v1258, 1.442695
    %v1262 = vpow.pop %v1261
    %v1263 = vsel %vm386, %v1260, 0.0
    %1264 = vadd.xlane.f32.xlu0 %v1263
    %v1265 = vpop.xlane.xlu0 %1264
    %v1266 = vsel %vm386, %v1262, 0.0
    %1267 = vadd.xlane.f32.xlu0 %v1266
    %v1268 = vpop.xlane.xlu0 %1267
    %v1269 = vrcp.pop %v1265
    %v1270 = vrcp.pop %v1268
    %v1271 = vmul.f32 %v1260, %v1269
    %v1272 = vmul.f32 %v1262, %v1270
    %v1273 = vpack.c.bf16 %v1272, %v1271
    %v1274 = vpack.c.bf16 %v1135, %v1131
    %v1276 = vsel %vm386, %v1273, 0
    %1278 = vmatprep.subr.bf16.mxu0 0
    %1279 = vmatpush1.bf16.msra.mxu0 0
    %1280 = vmatprep.subr.bf16.mxu0 0
    %1281 = vmatpush1.bf16.msra.mxu0 0
    %1282 = vmatprep.subr.bf16.mxu0 0
    %1283 = vmatpush1.bf16.msra.mxu0 0
    %1284 = vmatprep.subr.bf16.mxu0 0
    %1285 = vmatpush1.bf16.msra.mxu0 0
    %1286 = vmatprep.subr.bf16.mxu0 0
    %1287 = vmatpush1.bf16.msra.mxu0 0
    %1288 = vmatprep.subr.bf16.mxu0 0
    %1289 = vmatpush1.bf16.msra.mxu0 0
    %1290 = vmatprep.subr.bf16.mxu0 0
    %1291 = vmatpush1.bf16.msra.mxu0 0
    %1292 = vmatprep.subr.bf16.mxu0 0
    %1293 = vmatpush1.bf16.msra.mxu0 %v1274
    %1294 = vmatprep.subr.bf16.mxu0 0
    %1295 = vmatpush2.bf16.msra.mxu0 0
    %1296 = vmatprep.subr.bf16.mxu0 0
    %1297 = vmatpush2.bf16.msra.mxu0 0
    %1298 = vmatprep.subr.bf16.mxu0 0
    %1299 = vmatpush2.bf16.msra.mxu0 0
    %1300 = vmatprep.subr.bf16.mxu0 0
    %1301 = vmatpush2.bf16.msra.mxu0 0
    %1302 = vmatprep.subr.bf16.mxu0 0
    %1303 = vmatpush2.bf16.msra.mxu0 0
    %1304 = vmatprep.subr.bf16.mxu0 0
    %1305 = vmatpush2.bf16.msra.mxu0 0
    %1306 = vmatprep.subr.bf16.mxu0 0
    %1307 = vmatpush2.bf16.msra.mxu0 0
    %1308 = vmatprep.subr.bf16.mxu0 0
    %1309 = vmatpush2.bf16.msra.mxu0 0
    %1310 = vmatprep.mubr.bf16.mxu0 0
    %1311 = vmatmul.mubr.bf16.gmra.mxu0 %v1276
    %v1312 = vpop.f32.mrf.mxu0
    %v1313 = vadd.f32 0.0, %v1312
    %v1314 = vpop.f32.mrf.mxu0
    %v1315 = vpop.f32.mrf.mxu0
    %v1316 = vadd.f32 0.0, %v1315
    %v1317 = vpop.f32.mrf.mxu0
    %1318 = vdwg.mxu0
    %1320 = vrot.lane.b32.xlu0 %v1199, 96
    %v1321 = vpop.permute.xlu0 %1320
    %1322 = vrot.lane.b32.xlu0 %v1200, 32
    %v1323 = vpop.permute.xlu0 %1322
    %v1325 = vsel %vm389, %v1321, 0
    %v1328 = vsel %vm389, %v1323, 0
    %1330 = vmatprep.subr.bf16.mxu0 0
    %1331 = vmatpush1.bf16.xpose.msra.mxu0 0
    %1332 = vmatprep.subr.bf16.mxu0 0
    %1333 = vmatpush1.bf16.xpose.msra.mxu0 0
    %1334 = vmatprep.subr.bf16.mxu0 0
    %1335 = vmatpush1.bf16.xpose.msra.mxu0 0
    %1336 = vmatprep.subr.bf16.mxu0 0
    %1337 = vmatpush1.bf16.xpose.msra.mxu0 0
    %1338 = vmatprep.subr.bf16.mxu0 0
    %1339 = vmatpush1.bf16.xpose.msra.mxu0 0
    %1340 = vmatprep.subr.bf16.mxu0 0
    %1341 = vmatpush1.bf16.xpose.msra.mxu0 0
    %1342 = vmatprep.subr.bf16.mxu0 0
    %1343 = vmatpush1.bf16.xpose.msra.mxu0 0
    %1344 = vmatprep.subr.bf16.mxu0 0
    %1345 = vmatpush1.bf16.xpose.msra.mxu0 %v1328
    %1346 = vmatprep.subr.bf16.mxu0 0
    %1347 = vmatpush2.bf16.xpose.msra.mxu0 0
    %1348 = vmatprep.subr.bf16.mxu0 0
    %1349 = vmatpush2.bf16.xpose.msra.mxu0 0
    %1350 = vmatprep.subr.bf16.mxu0 0
    %1351 = vmatpush2.bf16.xpose.msra.mxu0 0
    %1352 = vmatprep.subr.bf16.mxu0 0
    %1353 = vmatpush2.bf16.xpose.msra.mxu0 0
    %1354 = vmatprep.subr.bf16.mxu0 0
    %1355 = vmatpush2.bf16.xpose.msra.mxu0 0
    %1356 = vmatprep.subr.bf16.mxu0 0
    %1357 = vmatpush2.bf16.xpose.msra.mxu0 0
    %1358 = vmatprep.subr.bf16.mxu0 0
    %1359 = vmatpush2.bf16.xpose.msra.mxu0 0
    %1360 = vmatprep.subr.bf16.mxu0 0
    %1361 = vmatpush2.bf16.xpose.msra.mxu0 0
    %1362 = vmatprep.mubr.bf16.mxu0 0
    %1363 = vmatmul.mubr.bf16.gmra.mxu0 %v1325
    %v1364 = vpop.f32.mrf.mxu0
    %v1365 = vadd.f32 %v50, %v1364
    %v1366 = vpop.f32.mrf.mxu0
    %v1367 = vpop.f32.mrf.mxu0
    %v1368 = vadd.f32 %v51, %v1367
    %v1369 = vpop.f32.mrf.mxu0
    %1370 = vdwg.mxu0
    %v1371 = vsel %vm386, %v1365, -inf
    %1372 = vmax.xlane.f32.xlu0 %v1371
    %v1373 = vpop.xlane.xlu0 %1372
    %v1374 = vsel %vm386, %v1368, -inf
    %1375 = vmax.xlane.f32.xlu0 %v1374
    %v1376 = vpop.xlane.xlu0 %1375
    %v1377 = vsub.f32 %v1365, %v1373
    %v1378 = vsub.f32 %v1368, %v1376
    %v1379 = vmul.f32 %v1377, 1.442695
    %v1380 = vpow.pop %v1379
    %v1381 = vmul.f32 %v1378, 1.442695
    %v1382 = vpow.pop %v1381
    %v1383 = vsel %vm386, %v1380, 0.0
    %1384 = vadd.xlane.f32.xlu0 %v1383
    %v1385 = vpop.xlane.xlu0 %1384
    %v1386 = vsel %vm386, %v1382, 0.0
    %1387 = vadd.xlane.f32.xlu0 %v1386
    %v1388 = vpop.xlane.xlu0 %1387
    %v1389 = vrcp.pop %v1385
    %v1390 = vrcp.pop %v1388
    %v1391 = vmul.f32 %v1380, %v1389
    %v1392 = vmul.f32 %v1382, %v1390
    %v1393 = vpack.c.bf16 %v1392, %v1391
    %1395 = vrot.lane.b32.xlu0 %v1274, 96
    %v1396 = vpop.permute.xlu0 %1395
    %v1399 = vsel %vm386, %v1393, 0
    %1401 = vmatprep.subr.bf16.mxu0 0
    %1402 = vmatpush1.bf16.msra.mxu0 0
    %1403 = vmatprep.subr.bf16.mxu0 0
    %1404 = vmatpush1.bf16.msra.mxu0 0
    %1405 = vmatprep.subr.bf16.mxu0 0
    %1406 = vmatpush1.bf16.msra.mxu0 0
    %1407 = vmatprep.subr.bf16.mxu0 0
    %1408 = vmatpush1.bf16.msra.mxu0 0
    %1409 = vmatprep.subr.bf16.mxu0 0
    %1410 = vmatpush1.bf16.msra.mxu0 0
    %1411 = vmatprep.subr.bf16.mxu0 0
    %1412 = vmatpush1.bf16.msra.mxu0 0
    %1413 = vmatprep.subr.bf16.mxu0 0
    %1414 = vmatpush1.bf16.msra.mxu0 0
    %1415 = vmatprep.subr.bf16.mxu0 0
    %1416 = vmatpush1.bf16.msra.mxu0 %v1396
    %1417 = vmatprep.subr.bf16.mxu0 0
    %1418 = vmatpush2.bf16.msra.mxu0 0
    %1419 = vmatprep.subr.bf16.mxu0 0
    %1420 = vmatpush2.bf16.msra.mxu0 0
    %1421 = vmatprep.subr.bf16.mxu0 0
    %1422 = vmatpush2.bf16.msra.mxu0 0
    %1423 = vmatprep.subr.bf16.mxu0 0
    %1424 = vmatpush2.bf16.msra.mxu0 0
    %1425 = vmatprep.subr.bf16.mxu0 0
    %1426 = vmatpush2.bf16.msra.mxu0 0
    %1427 = vmatprep.subr.bf16.mxu0 0
    %1428 = vmatpush2.bf16.msra.mxu0 0
    %1429 = vmatprep.subr.bf16.mxu0 0
    %1430 = vmatpush2.bf16.msra.mxu0 0
    %1431 = vmatprep.subr.bf16.mxu0 0
    %1432 = vmatpush2.bf16.msra.mxu0 0
    %1433 = vmatprep.mubr.bf16.mxu0 0
    %1434 = vmatmul.mubr.bf16.gmra.mxu0 %v1399
    %v1435 = vpop.f32.mrf.mxu0
    %v1436 = vadd.f32 0.0, %v1435
    %v1437 = vpop.f32.mrf.mxu0
    %v1438 = vpop.f32.mrf.mxu0
    %v1439 = vadd.f32 0.0, %v1438
    %v1440 = vpop.f32.mrf.mxu0
    %1441 = vdwg.mxu0
    %1444 = vrot.lane.b32.xlu0 %v1436, 32
    %v1445 = vpop.permute.xlu0 %1444
    %1446 = vrot.lane.b32.xlu0 %v1439, 32
    %v1447 = vpop.permute.xlu0 %1446
    %v1450 = vsel %vm389, %v1313, %v1445
    %v1451 = vsel %vm389, %v1316, %v1447
    %s1452 = scalar_lea.vmem %s8, 32
    %v1453 = vld [vmem:[%s1452] sm:$0xf]
    %v1454 = vld [vmem:[%s1452 + $0x4] sm:$0xf]
    %v1455 = vld [vmem:[%s1452 + $0x8] sm:$0xf]
    %v1456 = vld [vmem:[%s1452 + $0xc] sm:$0xf]
    %v1457 = vld [vmem:[%s1452 + $0x10] sm:$0xf]
    %v1458 = vld [vmem:[%s1452 + $0x14] sm:$0xf]
    %v1459 = vld [vmem:[%s1452 + $0x18] sm:$0xf]
    %v1460 = vld [vmem:[%s1452 + $0x1c] sm:$0xf]
    %v1461 = vpack.c.bf16 %v1451, %v1450
    %v1470 = vunpack.c.l.b16 %v1453
    %v1471 = vunpack.c.l.b16 %v1454
    %v1472 = vunpack.c.l.b16 %v1455
    %v1473 = vunpack.c.l.b16 %v1456
    %v1474 = vunpack.c.l.b16 %v1457
    %v1475 = vunpack.c.l.b16 %v1458
    %v1476 = vunpack.c.l.b16 %v1459
    %v1477 = vunpack.c.l.b16 %v1460
    %v1478 = vpack.c.b16 %v1471, %v1470
    %v1479 = vpack.c.b16 %v1473, %v1472
    %v1480 = vpack.c.b16 %v1475, %v1474
    %v1481 = vpack.c.b16 %v1477, %v1476
    %v1487 = vsel %vm249, %v1461, 0
    %1489 = vmatprep.subr.bf16.mxu0 0
    %1490 = vmatpush1.bf16.msra.mxu0 0
    %1491 = vmatprep.subr.bf16.mxu0 0
    %1492 = vmatpush1.bf16.msra.mxu0 0
    %1493 = vmatprep.subr.bf16.mxu0 0
    %1494 = vmatpush1.bf16.msra.mxu0 0
    %1495 = vmatprep.subr.bf16.mxu0 0
    %1496 = vmatpush1.bf16.msra.mxu0 0
    %1497 = vmatprep.subr.bf16.mxu0 0
    %1498 = vmatpush1.bf16.msra.mxu0 %v1481
    %1499 = vmatprep.subr.bf16.mxu0 0
    %1500 = vmatpush1.bf16.msra.mxu0 %v1480
    %1501 = vmatprep.subr.bf16.mxu0 0
    %1502 = vmatpush1.bf16.msra.mxu0 %v1479
    %1503 = vmatprep.subr.bf16.mxu0 0
    %1504 = vmatpush1.bf16.msra.mxu0 %v1478
    %1505 = vmatprep.subr.bf16.mxu0 0
    %1506 = vmatpush2.bf16.msra.mxu0 0
    %1507 = vmatprep.subr.bf16.mxu0 0
    %1508 = vmatpush2.bf16.msra.mxu0 0
    %1509 = vmatprep.subr.bf16.mxu0 0
    %1510 = vmatpush2.bf16.msra.mxu0 0
    %1511 = vmatprep.subr.bf16.mxu0 0
    %1512 = vmatpush2.bf16.msra.mxu0 0
    %1513 = vmatprep.subr.bf16.mxu0 0
    %1514 = vmatpush2.bf16.msra.mxu0 0
    %1515 = vmatprep.subr.bf16.mxu0 0
    %1516 = vmatpush2.bf16.msra.mxu0 0
    %1517 = vmatprep.subr.bf16.mxu0 0
    %1518 = vmatpush2.bf16.msra.mxu0 0
    %1519 = vmatprep.subr.bf16.mxu0 0
    %1520 = vmatpush2.bf16.msra.mxu0 0
    %1521 = vmatprep.mubr.bf16.mxu0 0
    %1522 = vmatmul.mubr.bf16.gmra.mxu0 %v1487
    %v1523 = vpop.f32.mrf.mxu0
    %v1524 = vadd.f32 0.0, %v1523
    %v1525 = vpop.f32.mrf.mxu0
    %v1526 = vpop.f32.mrf.mxu0
    %v1527 = vadd.f32 0.0, %v1526
    %v1528 = vpop.f32.mrf.mxu0
    %1529 = vdwg.mxu0
    %v1530 = vadd.f32 %v1013, %v1524
    %v1531 = vadd.f32 %v1014, %v1527
    %s1532 = scalar_lea.vmem %s9, 1
    %v1533 = vld [vmem:[%s1532] sm:$0x1]
    %v1534 = vmul.f32 %v1530, %v1530
    %v1535 = vmul.f32 %v1531, %v1531
    %v1536 = vsel %vm249, %v1534, 0.0
    %1537 = vadd.xlane.f32.xlu0 %v1536
    %v1538 = vpop.xlane.xlu0 %1537
    %v1539 = vsel %vm249, %v1535, 0.0
    %1540 = vadd.xlane.f32.xlu0 %v1539
    %v1541 = vpop.xlane.xlu0 %1540
    %v1542 = vmul.f32 %v1538, %v256
    %v1543 = vmul.f32 %v1541, %v256
    %v1544 = vadd.f32 %v1542, 1e-05
    %v1545 = vadd.f32 %v1543, 1e-05
    %v1546 = vrsqrt.pop %v1544
    %v1547 = vrsqrt.pop %v1545
    %v1548 = vmul.f32 %v1530, %v1546
    %v1549 = vmul.f32 %v1531, %v1547
    %v1551 = vlaneseq
    %v1552 = vshrl.u32 %v1551, 7
    %v1553 = vsub.s32 0, %v1552
    %v1554 = vrot.slane %v1533, %v1553
    %v1556 = vmul.f32 %v1548, %v1554
    %v1557 = vmul.f32 %v1549, %v1554
    %s1558 = scalar_lea.vmem %s10, 64
    %v1559 = vld [vmem:[%s1558] sm:$0xff]
    %v1560 = vld [vmem:[%s1558 + $0x8] sm:$0xff]
    %v1561 = vld [vmem:[%s1558 + $0x10] sm:$0xff]
    %v1562 = vld [vmem:[%s1558 + $0x18] sm:$0xff]
    %v1563 = vld [vmem:[%s1558 + $0x20] sm:$0xff]
    %v1564 = vld [vmem:[%s1558 + $0x28] sm:$0xff]
    %v1565 = vld [vmem:[%s1558 + $0x30] sm:$0xff]
    %v1566 = vld [vmem:[%s1558 + $0x38] sm:$0xff]
    %v1567 = vpack.c.bf16 %v1557, %v1556
    %v1576 = vunpack.c.l.b16 %v1559
    %v1577 = vunpack.c.h.b16 %v1559
    %v1578 = vunpack.c.l.b16 %v1560
    %v1579 = vunpack.c.h.b16 %v1560
    %v1580 = vunpack.c.l.b16 %v1561
    %v1581 = vunpack.c.h.b16 %v1561
    %v1582 = vunpack.c.l.b16 %v1562
    %v1583 = vunpack.c.h.b16 %v1562
    %v1584 = vunpack.c.l.b16 %v1563
    %v1585 = vunpack.c.h.b16 %v1563
    %v1586 = vunpack.c.l.b16 %v1564
    %v1587 = vunpack.c.h.b16 %v1564
    %v1588 = vunpack.c.l.b16 %v1565
    %v1589 = vunpack.c.h.b16 %v1565
    %v1590 = vunpack.c.l.b16 %v1566
    %v1591 = vunpack.c.h.b16 %v1566
    %v1592 = vpack.c.b16 %v1578, %v1576
    %v1593 = vpack.c.b16 %v1579, %v1577
    %v1594 = vpack.c.b16 %v1582, %v1580
    %v1595 = vpack.c.b16 %v1583, %v1581
    %v1596 = vpack.c.b16 %v1586, %v1584
    %v1597 = vpack.c.b16 %v1587, %v1585
    %v1598 = vpack.c.b16 %v1590, %v1588
    %v1599 = vpack.c.b16 %v1591, %v1589
    %v1609 = vsel %vm249, %v1567, 0
    %1611 = vmatprep.subr.bf16.mxu0 0
    %1612 = vmatpush1.bf16.msra.mxu0 0
    %1613 = vmatprep.subr.bf16.mxu0 0
    %1614 = vmatpush1.bf16.msra.mxu0 0
    %1615 = vmatprep.subr.bf16.mxu0 0
    %1616 = vmatpush1.bf16.msra.mxu0 0
    %1617 = vmatprep.subr.bf16.mxu0 0
    %1618 = vmatpush1.bf16.msra.mxu0 0
    %1619 = vmatprep.subr.bf16.mxu0 %v1599
    %1620 = vmatpush1.bf16.msra.mxu0 %v1598
    %1621 = vmatprep.subr.bf16.mxu0 %v1597
    %1622 = vmatpush1.bf16.msra.mxu0 %v1596
    %1623 = vmatprep.subr.bf16.mxu0 %v1595
    %1624 = vmatpush1.bf16.msra.mxu0 %v1594
    %1625 = vmatprep.subr.bf16.mxu0 %v1593
    %1626 = vmatpush1.bf16.msra.mxu0 %v1592
    %1627 = vmatprep.subr.bf16.mxu0 0
    %1628 = vmatpush2.bf16.msra.mxu0 0
    %1629 = vmatprep.subr.bf16.mxu0 0
    %1630 = vmatpush2.bf16.msra.mxu0 0
    %1631 = vmatprep.subr.bf16.mxu0 0
    %1632 = vmatpush2.bf16.msra.mxu0 0
    %1633 = vmatprep.subr.bf16.mxu0 0
    %1634 = vmatpush2.bf16.msra.mxu0 0
    %1635 = vmatprep.subr.bf16.mxu0 0
    %1636 = vmatpush2.bf16.msra.mxu0 0
    %1637 = vmatprep.subr.bf16.mxu0 0
    %1638 = vmatpush2.bf16.msra.mxu0 0
    %1639 = vmatprep.subr.bf16.mxu0 0
    %1640 = vmatpush2.bf16.msra.mxu0 0
    %1641 = vmatprep.subr.bf16.mxu0 0
    %1642 = vmatpush2.bf16.msra.mxu0 0
    %1643 = vmatprep.mubr.bf16.mxu0 0
    %1644 = vmatmul.mubr.bf16.gmra.mxu0 %v1609
    %v1645 = vpop.f32.mrf.mxu0
    %v1646 = vadd.f32 0.0, %v1645
    %v1647 = vpop.f32.mrf.mxu0
    %v1648 = vadd.f32 0.0, %v1647
    %v1649 = vpop.f32.mrf.mxu0
    %v1650 = vadd.f32 0.0, %v1649
    %v1651 = vpop.f32.mrf.mxu0
    %v1652 = vadd.f32 0.0, %v1651
    %1653 = vdwg.mxu0
    %v1654 = vsub.f32 0.0, %v1646
    %v1655 = vsub.f32 0.0, %v1650
    %v1656 = vmul.f32 %v1654, 1.442695
    %v1657 = vpow.pop %v1656
    %v1658 = vmul.f32 %v1655, 1.442695
    %v1659 = vpow.pop %v1658
    %v1660 = vadd.f32 %v1657, 1.0
    %v1661 = vadd.f32 %v1659, 1.0
    %v1662 = vrcp.pop %v1660
    %v1663 = vrcp.pop %v1661
    %v1664 = vmul.f32 %v1646, %v1662
    %v1665 = vmul.f32 %v1650, %v1663
    %v1666 = vmul.f32 %v1664, %v1648
    %v1667 = vmul.f32 %v1665, %v1652
    %s1668 = scalar_lea.vmem %s11, 64
    %v1669 = vld [vmem:[%s1668] sm:$0xf]
    %v1670 = vld [vmem:[%s1668 + $0x4] sm:$0xf]
    %v1671 = vld [vmem:[%s1668 + $0x8] sm:$0xf]
    %v1672 = vld [vmem:[%s1668 + $0xc] sm:$0xf]
    %v1673 = vld [vmem:[%s1668 + $0x10] sm:$0xf]
    %v1674 = vld [vmem:[%s1668 + $0x14] sm:$0xf]
    %v1675 = vld [vmem:[%s1668 + $0x18] sm:$0xf]
    %v1676 = vld [vmem:[%s1668 + $0x1c] sm:$0xf]
    %v1677 = vld [vmem:[%s1668 + $0x20] sm:$0xf]
    %v1678 = vld [vmem:[%s1668 + $0x24] sm:$0xf]
    %v1679 = vld [vmem:[%s1668 + $0x28] sm:$0xf]
    %v1680 = vld [vmem:[%s1668 + $0x2c] sm:$0xf]
    %v1681 = vld [vmem:[%s1668 + $0x30] sm:$0xf]
    %v1682 = vld [vmem:[%s1668 + $0x34] sm:$0xf]
    %v1683 = vld [vmem:[%s1668 + $0x38] sm:$0xf]
    %v1684 = vld [vmem:[%s1668 + $0x3c] sm:$0xf]
    %v1685 = vpack.c.bf16 %v1667, %v1666
    %v1702 = vunpack.c.l.b16 %v1669
    %v1703 = vunpack.c.l.b16 %v1670
    %v1704 = vunpack.c.l.b16 %v1671
    %v1705 = vunpack.c.l.b16 %v1672
    %v1706 = vunpack.c.l.b16 %v1673
    %v1707 = vunpack.c.l.b16 %v1674
    %v1708 = vunpack.c.l.b16 %v1675
    %v1709 = vunpack.c.l.b16 %v1676
    %v1710 = vunpack.c.l.b16 %v1677
    %v1711 = vunpack.c.l.b16 %v1678
    %v1712 = vunpack.c.l.b16 %v1679
    %v1713 = vunpack.c.l.b16 %v1680
    %v1714 = vunpack.c.l.b16 %v1681
    %v1715 = vunpack.c.l.b16 %v1682
    %v1716 = vunpack.c.l.b16 %v1683
    %v1717 = vunpack.c.l.b16 %v1684
    %v1718 = vpack.c.b16 %v1703, %v1702
    %v1719 = vpack.c.b16 %v1705, %v1704
    %v1720 = vpack.c.b16 %v1707, %v1706
    %v1721 = vpack.c.b16 %v1709, %v1708
    %v1722 = vpack.c.b16 %v1711, %v1710
    %v1723 = vpack.c.b16 %v1713, %v1712
    %v1724 = vpack.c.b16 %v1715, %v1714
    %v1725 = vpack.c.b16 %v1717, %v1716
    %1734 = vmatprep.subr.bf16.mxu0 0
    %1735 = vmatpush1.bf16.msra.mxu0 %v1725
    %1736 = vmatprep.subr.bf16.mxu0 0
    %1737 = vmatpush1.bf16.msra.mxu0 %v1724
    %1738 = vmatprep.subr.bf16.mxu0 0
    %1739 = vmatpush1.bf16.msra.mxu0 %v1723
    %1740 = vmatprep.subr.bf16.mxu0 0
    %1741 = vmatpush1.bf16.msra.mxu0 %v1722
    %1742 = vmatprep.subr.bf16.mxu0 0
    %1743 = vmatpush1.bf16.msra.mxu0 %v1721
    %1744 = vmatprep.subr.bf16.mxu0 0
    %1745 = vmatpush1.bf16.msra.mxu0 %v1720
    %1746 = vmatprep.subr.bf16.mxu0 0
    %1747 = vmatpush1.bf16.msra.mxu0 %v1719
    %1748 = vmatprep.subr.bf16.mxu0 0
    %1749 = vmatpush1.bf16.msra.mxu0 %v1718
    %1750 = vmatprep.subr.bf16.mxu0 0
    %1751 = vmatpush2.bf16.msra.mxu0 0
    %1752 = vmatprep.subr.bf16.mxu0 0
    %1753 = vmatpush2.bf16.msra.mxu0 0
    %1754 = vmatprep.subr.bf16.mxu0 0
    %1755 = vmatpush2.bf16.msra.mxu0 0
    %1756 = vmatprep.subr.bf16.mxu0 0
    %1757 = vmatpush2.bf16.msra.mxu0 0
    %1758 = vmatprep.subr.bf16.mxu0 0
    %1759 = vmatpush2.bf16.msra.mxu0 0
    %1760 = vmatprep.subr.bf16.mxu0 0
    %1761 = vmatpush2.bf16.msra.mxu0 0
    %1762 = vmatprep.subr.bf16.mxu0 0
    %1763 = vmatpush2.bf16.msra.mxu0 0
    %1764 = vmatprep.subr.bf16.mxu0 0
    %1765 = vmatpush2.bf16.msra.mxu0 0
    %1766 = vmatprep.mubr.bf16.mxu0 0
    %1767 = vmatmul.mubr.bf16.gmra.mxu0 %v1685
    %v1768 = vpop.f32.mrf.mxu0
    %v1769 = vadd.f32 0.0, %v1768
    %v1770 = vpop.f32.mrf.mxu0
    %v1771 = vpop.f32.mrf.mxu0
    %v1772 = vadd.f32 0.0, %v1771
    %v1773 = vpop.f32.mrf.mxu0
    %1774 = vdwg.mxu0
    %v1775 = vadd.f32 %v1530, %v1769
    %v1776 = vadd.f32 %v1531, %v1772
    %v1777 = vld [vmem:[%s12] sm:$0x1]
    %v1778 = vmul.f32 %v1775, %v1775
    %v1779 = vmul.f32 %v1776, %v1776
    %v1780 = vsel %vm249, %v1778, 0.0
    %1781 = vadd.xlane.f32.xlu0 %v1780
    %v1782 = vpop.xlane.xlu0 %1781
    %v1783 = vsel %vm249, %v1779, 0.0
    %1784 = vadd.xlane.f32.xlu0 %v1783
    %v1785 = vpop.xlane.xlu0 %1784
    %v1786 = vmul.f32 %v1782, %v256
    %v1787 = vmul.f32 %v1785, %v256
    %v1788 = vadd.f32 %v1786, 1e-05
    %v1789 = vadd.f32 %v1787, 1e-05
    %v1790 = vrsqrt.pop %v1788
    %v1791 = vrsqrt.pop %v1789
    %v1792 = vmul.f32 %v1775, %v1790
    %v1793 = vmul.f32 %v1776, %v1791
    %v1795 = vlaneseq
    %v1796 = vshrl.u32 %v1795, 7
    %v1797 = vsub.s32 0, %v1796
    %v1798 = vrot.slane %v1777, %v1797
    %v1800 = vmul.f32 %v1792, %v1798
    %v1801 = vmul.f32 %v1793, %v1798
    %v1802 = vld [vmem:[%s5] sm:$0xff]
    %v1803 = vld [vmem:[%s5 + $0x8] sm:$0xff]
    %v1804 = vld [vmem:[%s5 + $0x10] sm:$0xff]
    %v1805 = vld [vmem:[%s5 + $0x18] sm:$0xff]
    %v1806 = vld [vmem:[%s5 + $0x20] sm:$0xff]
    %v1807 = vld [vmem:[%s5 + $0x28] sm:$0xff]
    %v1808 = vld [vmem:[%s5 + $0x30] sm:$0xff]
    %v1809 = vld [vmem:[%s5 + $0x38] sm:$0xff]
    %v1810 = vpack.c.bf16 %v1801, %v1800
    %v1819 = vunpack.c.l.b16 %v1802
    %v1820 = vunpack.c.h.b16 %v1802
    %v1821 = vunpack.c.l.b16 %v1803
    %v1822 = vunpack.c.h.b16 %v1803
    %v1823 = vunpack.c.l.b16 %v1804
    %v1824 = vunpack.c.h.b16 %v1804
    %v1825 = vunpack.c.l.b16 %v1805
    %v1826 = vunpack.c.h.b16 %v1805
    %v1827 = vunpack.c.l.b16 %v1806
    %v1828 = vunpack.c.h.b16 %v1806
    %v1829 = vunpack.c.l.b16 %v1807
    %v1830 = vunpack.c.h.b16 %v1807
    %v1831 = vunpack.c.l.b16 %v1808
    %v1832 = vunpack.c.h.b16 %v1808
    %v1833 = vunpack.c.l.b16 %v1809
    %v1834 = vunpack.c.h.b16 %v1809
    %v1835 = vpack.c.b16 %v1821, %v1819
    %v1836 = vpack.c.b16 %v1822, %v1820
    %v1837 = vpack.c.b16 %v1825, %v1823
    %v1838 = vpack.c.b16 %v1826, %v1824
    %v1839 = vpack.c.b16 %v1829, %v1827
    %v1840 = vpack.c.b16 %v1830, %v1828
    %v1841 = vpack.c.b16 %v1833, %v1831
    %v1842 = vpack.c.b16 %v1834, %v1832
    %v1852 = vsel %vm249, %v1810, 0
    %1854 = vmatprep.subr.bf16.mxu0 0
    %1855 = vmatpush1.bf16.msra.mxu0 0
    %1856 = vmatprep.subr.bf16.mxu0 0
    %1857 = vmatpush1.bf16.msra.mxu0 0
    %1858 = vmatprep.subr.bf16.mxu0 0
    %1859 = vmatpush1.bf16.msra.mxu0 0
    %1860 = vmatprep.subr.bf16.mxu0 0
    %1861 = vmatpush1.bf16.msra.mxu0 0
    %1862 = vmatprep.subr.bf16.mxu0 %v1842
    %1863 = vmatpush1.bf16.msra.mxu0 %v1841
    %1864 = vmatprep.subr.bf16.mxu0 %v1840
    %1865 = vmatpush1.bf16.msra.mxu0 %v1839
    %1866 = vmatprep.subr.bf16.mxu0 %v1838
    %1867 = vmatpush1.bf16.msra.mxu0 %v1837
    %1868 = vmatprep.subr.bf16.mxu0 %v1836
    %1869 = vmatpush1.bf16.msra.mxu0 %v1835
    %1870 = vmatprep.subr.bf16.mxu0 0
    %1871 = vmatpush2.bf16.msra.mxu0 0
    %1872 = vmatprep.subr.bf16.mxu0 0
    %1873 = vmatpush2.bf16.msra.mxu0 0
    %1874 = vmatprep.subr.bf16.mxu0 0
    %1875 = vmatpush2.bf16.msra.mxu0 0
    %1876 = vmatprep.subr.bf16.mxu0 0
    %1877 = vmatpush2.bf16.msra.mxu0 0
    %1878 = vmatprep.subr.bf16.mxu0 0
    %1879 = vmatpush2.bf16.msra.mxu0 0
    %1880 = vmatprep.subr.bf16.mxu0 0
    %1881 = vmatpush2.bf16.msra.mxu0 0
    %1882 = vmatprep.subr.bf16.mxu0 0
    %1883 = vmatpush2.bf16.msra.mxu0 0
    %1884 = vmatprep.subr.bf16.mxu0 0
    %1885 = vmatpush2.bf16.msra.mxu0 0
    %1886 = vmatprep.mubr.bf16.mxu0 0
    %1887 = vmatmul.mubr.bf16.gmra.mxu0 %v1852
    %v1888 = vpop.f32.mrf.mxu0
    %v1889 = vadd.f32 0.0, %v1888
    %v1890 = vpop.f32.mrf.mxu0
    %v1891 = vadd.f32 0.0, %v1890
    %v1892 = vpop.f32.mrf.mxu0
    %v1893 = vadd.f32 0.0, %v1892
    %v1894 = vpop.f32.mrf.mxu0
    %v1895 = vadd.f32 0.0, %v1894
    %1896 = vdwg.mxu0
    %1897 = vst [vmem:[#allocation2] sm:$0xff] %v1889
    %1898 = vst [vmem:[#allocation2 + $0x8] sm:$0xff] %v1891
    %1899 = vst [vmem:[#allocation2 + $0x10] sm:$0xff] %v1893
    %1900 = vst [vmem:[#allocation2 + $0x18] sm:$0xff] %v1895
    // Predicated region
    $region54: #{smollm_forward.1} parent=1 // pred_check
      _
    $region55: #{smollm_forward.1} parent=1 // pred_check_branch
      %1902 = sbr.rel (0) target = $region57
    $region56: #{smollm_forward.1} parent=1 // pred_region
      %s1904 = ssub.s32 512, 512
      %1905 = vsyncadd [#allocation3], %s1904
      %s1906 = sshll.u32 [#allocation2], 4
      %s1907 = int_to_ptr.vmem [resolvable:$true] %s1906
      %1912 = dma.vmem_to_hbm [thread:$0]  %s1907, 512, %s13, [#allocation3], 256, 256, 16
    $region57: #{smollm_forward.1} parent=1 // pred_fallthru
      _
    // Predicated region
    $region58: #{smollm_forward.1} parent=1 // pred_check
      _
    $region59: #{smollm_forward.1} parent=1 // pred_check_branch
      %1914 = sbr.rel (0) target = $region61
    $region60: #{smollm_forward.1} parent=1 // pred_region
      %1915 = dma.done [#allocation3], 512
    $region61: #{smollm_forward.1} parent=1 // pred_fallthru
      _
    %1916 = vsyncpa [#allocation3], 1

</llo_original>
